<compile_context>
chip_gen: v7x
topology: tpu7x:2x2x1
jax: 0.10.0
libtpu: 0.0.40
codegen_flags: <defaults>
</compile_context>

<pallas_src>
import jax
import jax.numpy as jnp
from jax import lax
from jax.experimental import pallas as pl
from jax.experimental.pallas import tpu as pltpu


def _round_up(x, m):
    return (x + m - 1) // m * m


# ------------------------- fused Pallas kernel -------------------------

def _make_oncf_kernel(num_layers):
    def kernel(*refs):
        ue_ref, ve_ref, gu_ref, gv_ref, eu_ref, ev_ref = refs[:6]
        conv_refs = refs[6:6 + 2 * num_layers]
        wp_ref, wc_ref, bp_ref = refs[6 + 2 * num_layers:9 + 2 * num_layers]
        out_ref = refs[9 + 2 * num_layers]

        f32 = jnp.float32

        # Flattened outer product x[t, h*D + w] = u[t, h] * v[t, w]  -> (T, D*D),
        # built via two matmuls against constant 0/1 expansion matrices (no reshapes,
        # no HBM materialization of the (N, D, D) tensor).
        x = (jnp.dot(ue_ref[...], eu_ref[...], preferred_element_type=f32)
             * jnp.dot(ve_ref[...], ev_ref[...], preferred_element_type=f32))

        # Fused conv tower: each 2x2/stride-2 conv + bias + ReLU is a dense matmul on the
        # flattened (C, H, W) activation; intermediates never leave VMEM.
        h = x
        for l in range(num_layers):
            m_ref = conv_refs[2 * l]
            b_ref = conv_refs[2 * l + 1]
            y = jnp.dot(h.astype(m_ref.dtype), m_ref[...], preferred_element_type=f32)
            h = jnp.maximum(y + b_ref[...], 0.0)          # bias/ReLU kept in f32 (v5e-safe)

        # GMF * + final Linear epilogue, written lane-dense as a (1, T) slab.
        gmf = gu_ref[...].astype(f32) * gv_ref[...].astype(f32)
        dn = (((1,), (1,)), ((), ()))                      # contract last dims: (8,K)x(T,K)->(8,T)
        t1 = lax.dot_general(wp_ref[...], gmf.astype(wp_ref.dtype), dn,
                             preferred_element_type=f32)
        t2 = lax.dot_general(wc_ref[...], h.astype(wc_ref.dtype), dn,
                             preferred_element_type=f32)
        # wp/wc are zero-padded to 8 rows host-side (sublane-aligned M); row 0 is the real one.
        out_ref[...] = ((t1 + t2)[0:1, :] + bp_ref[...]).astype(out_ref.dtype)

    return kernel


# ------------------------- host-side lowering helpers -------------------------

def _expand_conv_stack(convs, spatial):
    """Lower each 2x2/stride-2 Conv2d to a dense matmul on the flattened (C,H,W) activation.

    M[(c,h,w), (o,a,b)] = W[o,c,h-2a,w-2b] when the tap is in range, else 0, so that
    y_flat = x_flat @ M reproduces the conv exactly (flatten order matches NCHW .reshape(N,-1)).
    """
    mats = []
    h_sp = spatial
    for (w_l, b_l) in convs:
        o, c, _, _ = w_l.shape
        a_sp = h_sp // 2
        pp = jnp.arange(2)[:, None, None]
        hh = jnp.arange(h_sp)[None, :, None]
        aa = jnp.arange(a_sp)[None, None, :]
        sel = (hh == 2 * aa + pp).astype(w_l.dtype)        # (2, H, H/2): sel[p,h,a]=1 iff h==2a+p
        m = jnp.einsum('pha,qwb,ocpq->chwoab', sel, sel, w_l)
        m = m.reshape(c * h_sp * h_sp, o * a_sp * a_sp)
        bexp = jnp.broadcast_to(b_l[:, None, None], (o, a_sp, a_sp)).reshape(1, -1)
        mats.append((m, bexp))
        h_sp = a_sp
    return mats


# ------------------------- forward -------------------------

def oncf_forward(params, u, v, n, *, row_tile=512, compute_dtype=jnp.float32):
    b, nn = n.shape
    d = params["u_emb"].shape[1]

    # nn.Embedding gathers + pos/neg merge (XLA glue).
    u_rep = jnp.broadcast_to(u[:, None], (b, nn)).reshape(-1)
    u_ids = jnp.concatenate([u, u_rep])                    # (N,)
    v_ids = jnp.concatenate([v, n.reshape(-1)])            # (N,)

    ue = jnp.take(params["u_emb"], u_ids, axis=0).astype(compute_dtype)
    ve = jnp.take(params["v_emb"], v_ids, axis=0).astype(compute_dtype)
    gu = jnp.take(params["gmf_u_emb"], u_ids, axis=0).astype(compute_dtype)
    gv = jnp.take(params["gmf_v_emb"], v_ids, axis=0).astype(compute_dtype)

    n_rows = b * (1 + nn)
    tile = min(row_tile, _round_up(n_rows, 128))           # lane-dense, (8,128)-aligned
    n_pad = _round_up(n_rows, tile)
    pad_rows = lambda a: jnp.pad(a, ((0, n_pad - n_rows), (0, 0)))
    ue, ve, gu, gv = pad_rows(ue), pad_rows(ve), pad_rows(gu), pad_rows(gv)

    # Constant expansion matrices for the flattened outer product.
    eye = jnp.eye(d, dtype=compute_dtype)
    eu = jnp.repeat(eye, d, axis=1)                        # eu[h, h*D + w] = 1
    ev = jnp.tile(eye, (1, d))                             # ev[w, h*D + w] = 1

    # Conv tower lowered to dense per-layer matmul matrices (tiny, VMEM-resident).
    conv_mats = _expand_conv_stack(params["convs"], d)
    num_layers = len(conv_mats)

    # Final Linear split: [:d] multiplies the GMF product, [d:] multiplies the conv features.
    wp = jnp.pad(params["pred_w"][:, :d], ((0, 7), (0, 0))).astype(compute_dtype)   # (8, D)
    wc = jnp.pad(params["pred_w"][:, d:], ((0, 7), (0, 0))).astype(compute_dtype)   # (8, C_last)
    bp = params["pred_b"].reshape(1, 1).astype(jnp.float32)

    operands = [ue, ve, gu, gv, eu, ev]
    for m, bexp in conv_mats:
        operands += [m.astype(compute_dtype), bexp.astype(jnp.float32)]
    operands += [wp, wc, bp]

    row_spec = pl.BlockSpec((tile, d), lambda i: (i, 0))
    resident = lambda a: pl.BlockSpec(a.shape, lambda i: (0, 0))   # weights stay resident
    in_specs = [row_spec] * 4 + [resident(a) for a in operands[4:]]

    out = pl.pallas_call(
        _make_oncf_kernel(num_layers),
        out_shape=jax.ShapeDtypeStruct((1, n_pad), jnp.float32),
        grid_spec=pltpu.PrefetchScalarGridSpec(
            num_scalar_prefetch=0,
            grid=(n_pad // tile,),
            in_specs=in_specs,
            out_specs=pl.BlockSpec((1, tile), lambda i: (0, i)),
        ),
        compiler_params=pltpu.CompilerParams(
            dimension_semantics=("parallel",)),
    )(*operands)

    preds = out[0, :n_rows]
    return preds[:b], preds[b:]


# ------------------------- pure-JAX reference (for validation) -------------------------

def oncf_reference(params, u, v, n):
    b, nn = n.shape
    d = params["u_emb"].shape[1]
    gmf = params["gmf_u_emb"][u] * params["gmf_v_emb"][v]
    gmf_n = (params["gmf_u_emb"][jnp.broadcast_to(u[:, None], (b, nn))] *
             params["gmf_v_emb"][n]).reshape(-1, d)
    u_e = params["u_emb"][u]
    v_e = params["v_emb"][v]
    n_e = params["v_emb"][n.reshape(-1)]
    u_rep = jnp.broadcast_to(u_e[:, None, :], (b, nn, d)).reshape(-1, d)
    x = u_e[:, :, None] * v_e[:, None, :]
    x_n = u_rep[:, :, None] * n_e[:, None, :]

    def conv_ref(h):
        h = h[:, None, :, :]
        for w, bb in params["convs"]:
            h = jax.lax.conv_general_dilated(
                h, w, window_strides=(2, 2), padding="VALID",
                dimension_numbers=("NCHW", "OIHW", "NCHW"))
            h = jnp.maximum(h + bb[None, :, None, None], 0.0)
        return h.reshape(h.shape[0], -1)

    h, h_n = conv_ref(x), conv_ref(x_n)
    wp, bp = params["pred_w"], params["pred_b"]
    pred = (jnp.concatenate([gmf, h], axis=1) @ wp.T + bp).reshape(-1)
    pred_n = (jnp.concatenate([gmf_n, h_n], axis=1) @ wp.T + bp).reshape(-1)
    return pred, pred_n


# ------------------------- main -------------------------

if __name__ == "__main__":
    num_user, num_item, emb_dim = 8, 10, 16
    layers = [1, 4, 8, 16, 32]        # 4 conv stages: spatial 16 -> 8 -> 4 -> 2 -> 1
    batch, num_neg = 2, 3

    key = jax.random.PRNGKey(0)
    ks = jax.random.split(key, 16)

    params = {
        "gmf_u_emb": 0.5 * jax.random.normal(ks[0], (num_user, emb_dim), jnp.float32),
        "gmf_v_emb": 0.5 * jax.random.normal(ks[1], (num_item, emb_dim), jnp.float32),
        "u_emb":     0.5 * jax.random.normal(ks[2], (num_user, emb_dim), jnp.float32),
        "v_emb":     0.5 * jax.random.normal(ks[3], (num_item, emb_dim), jnp.float32),
    }
    convs = []
    for i, (cin, cout) in enumerate(zip(layers[:-1], layers[1:])):
        wk, bk = jax.random.split(ks[4 + i])
        scale = 1.0 / (cin * 4) ** 0.5
        convs.append((scale * jax.random.normal(wk, (cout, cin, 2, 2), jnp.float32),
                      scale * jax.random.normal(bk, (cout,), jnp.float32)))
    params["convs"] = tuple(convs)
    pk, bk = jax.random.split(ks[10])
    fan_in = emb_dim + layers[-1]
    params["pred_w"] = (1.0 / fan_in ** 0.5) * jax.random.normal(pk, (1, fan_in), jnp.float32)
    params["pred_b"] = (1.0 / fan_in ** 0.5) * jax.random.normal(bk, (1,), jnp.float32)

    u = jax.random.randint(ks[11], (batch,), 0, num_user)
    v = jax.random.randint(ks[12], (batch,), 0, num_item)
    n = jax.random.randint(ks[13], (batch, num_neg), 0, num_item)

    # TODO(synk): nn.Embedding index gathers stay as jnp.take glue (data-dependent gather).
    fwd = jax.jit(oncf_forward)
    pred, pred_n = fwd(params, u, v, n)
    jax.block_until_ready((pred, pred_n))

    ref_pred, ref_pred_n = oncf_reference(params, u, v, n)
    assert pred.shape == (batch,) and pred_n.shape == (batch * num_neg,)
    assert bool(jnp.allclose(pred, ref_pred, rtol=5e-2, atol=5e-3))
    assert bool(jnp.allclose(pred_n, ref_pred_n, rtol=5e-2, atol=5e-3))
    print("KERNEL_OK")
</pallas_src>

<mosaic_0001>
module attributes {stable_mosaic.version = 11 : i64} {
  func.func @kernel(%arg0: i32, %arg1: memref<128x16xf32, #tpu.memory_space<vmem>>, %arg2: memref<128x16xf32, #tpu.memory_space<vmem>>, %arg3: memref<128x16xf32, #tpu.memory_space<vmem>>, %arg4: memref<128x16xf32, #tpu.memory_space<vmem>>, %arg5: memref<16x256xf32, #tpu.memory_space<vmem>>, %arg6: memref<16x256xf32, #tpu.memory_space<vmem>>, %arg7: memref<256x256xf32, #tpu.memory_space<vmem>>, %arg8: memref<1x256xf32, #tpu.memory_space<vmem>>, %arg9: memref<256x128xf32, #tpu.memory_space<vmem>>, %arg10: memref<1x128xf32, #tpu.memory_space<vmem>>, %arg11: memref<128x64xf32, #tpu.memory_space<vmem>>, %arg12: memref<1x64xf32, #tpu.memory_space<vmem>>, %arg13: memref<64x32xf32, #tpu.memory_space<vmem>>, %arg14: memref<1x32xf32, #tpu.memory_space<vmem>>, %arg15: memref<8x16xf32, #tpu.memory_space<vmem>>, %arg16: memref<8x32xf32, #tpu.memory_space<vmem>>, %arg17: memref<1x1xf32, #tpu.memory_space<vmem>>, %arg18: memref<1x128xf32, #tpu.memory_space<vmem>>) attributes {dimension_semantics = [#tpu.dimension_semantics<parallel>], iteration_bounds = array<i64: 1>, scalar_prefetch = 0 : i64, scratch_operands = 0 : i64, tpu.core_type = #tpu.core_type<tc>, window_params = [{transform_indices = @transform_0, window_bounds = array<i64: 128, 16>}, {transform_indices = @transform_1, window_bounds = array<i64: 128, 16>}, {transform_indices = @transform_2, window_bounds = array<i64: 128, 16>}, {transform_indices = @transform_3, window_bounds = array<i64: 128, 16>}, {pipeline_mode = #tpu.pipeline_mode<synchronous>, transform_indices = @transform_4, window_bounds = array<i64: 16, 256>}, {pipeline_mode = #tpu.pipeline_mode<synchronous>, transform_indices = @transform_5, window_bounds = array<i64: 16, 256>}, {pipeline_mode = #tpu.pipeline_mode<synchronous>, transform_indices = @transform_6, window_bounds = array<i64: 256, 256>}, {pipeline_mode = #tpu.pipeline_mode<synchronous>, transform_indices = @transform_7, window_bounds = array<i64: 1, 256>}, {pipeline_mode = #tpu.pipeline_mode<synchronous>, transform_indices = @transform_8, window_bounds = array<i64: 256, 128>}, {pipeline_mode = #tpu.pipeline_mode<synchronous>, transform_indices = @transform_9, window_bounds = array<i64: 1, 128>}, {pipeline_mode = #tpu.pipeline_mode<synchronous>, transform_indices = @transform_10, window_bounds = array<i64: 128, 64>}, {pipeline_mode = #tpu.pipeline_mode<synchronous>, transform_indices = @transform_11, window_bounds = array<i64: 1, 64>}, {pipeline_mode = #tpu.pipeline_mode<synchronous>, transform_indices = @transform_12, window_bounds = array<i64: 64, 32>}, {pipeline_mode = #tpu.pipeline_mode<synchronous>, transform_indices = @transform_13, window_bounds = array<i64: 1, 32>}, {pipeline_mode = #tpu.pipeline_mode<synchronous>, transform_indices = @transform_14, window_bounds = array<i64: 8, 16>}, {pipeline_mode = #tpu.pipeline_mode<synchronous>, transform_indices = @transform_15, window_bounds = array<i64: 8, 32>}, {pipeline_mode = #tpu.pipeline_mode<synchronous>, transform_indices = @transform_16, window_bounds = array<i64: 1, 1>}, {transform_indices = @transform_17, window_bounds = array<i64: 1, 128>}]} {
    %c0 = arith.constant 0 : index
    %c0_0 = arith.constant 0 : index
    %0 = vector.load %arg1[%c0, %c0_0] : memref<128x16xf32, #tpu.memory_space<vmem>>, vector<128x16xf32>
    %c0_1 = arith.constant 0 : index
    %c0_2 = arith.constant 0 : index
    %1 = vector.load %arg5[%c0_1, %c0_2] : memref<16x256xf32, #tpu.memory_space<vmem>>, vector<16x256xf32>
    %cst = arith.constant dense<0.000000e+00> : vector<128x256xf32>
    %2 = tpu.matmul %0, %1, %cst {dimension_numbers = #tpu.dot_dimension_numbers<[1], [0], [0], [1], [0, 0, 1, 1], [], []>} : vector<128x16xf32>, vector<16x256xf32>, vector<128x256xf32> -> vector<128x256xf32>
    %c0_3 = arith.constant 0 : index
    %c0_4 = arith.constant 0 : index
    %3 = vector.load %arg2[%c0_3, %c0_4] : memref<128x16xf32, #tpu.memory_space<vmem>>, vector<128x16xf32>
    %c0_5 = arith.constant 0 : index
    %c0_6 = arith.constant 0 : index
    %4 = vector.load %arg6[%c0_5, %c0_6] : memref<16x256xf32, #tpu.memory_space<vmem>>, vector<16x256xf32>
    %cst_7 = arith.constant dense<0.000000e+00> : vector<128x256xf32>
    %5 = tpu.matmul %3, %4, %cst_7 {dimension_numbers = #tpu.dot_dimension_numbers<[1], [0], [0], [1], [0, 0, 1, 1], [], []>} : vector<128x16xf32>, vector<16x256xf32>, vector<128x256xf32> -> vector<128x256xf32>
    %6 = arith.mulf %2, %5 : vector<128x256xf32>
    %c0_8 = arith.constant 0 : index
    %c0_9 = arith.constant 0 : index
    %7 = vector.load %arg7[%c0_8, %c0_9] : memref<256x256xf32, #tpu.memory_space<vmem>>, vector<256x256xf32>
    %cst_10 = arith.constant dense<0.000000e+00> : vector<128x256xf32>
    %8 = tpu.matmul %6, %7, %cst_10 {dimension_numbers = #tpu.dot_dimension_numbers<[1], [0], [0], [1], [0, 0, 1, 1], [], []>} : vector<128x256xf32>, vector<256x256xf32>, vector<128x256xf32> -> vector<128x256xf32>
    %c0_11 = arith.constant 0 : index
    %c0_12 = arith.constant 0 : index
    %9 = vector.load %arg8[%c0_11, %c0_12] : memref<1x256xf32, #tpu.memory_space<vmem>>, vector<1x256xf32>
    %10 = vector.broadcast %9 : vector<1x256xf32> to vector<128x256xf32>
    %11 = arith.addf %8, %10 : vector<128x256xf32>
    %cst_13 = arith.constant 0.000000e+00 : f32
    %12 = vector.broadcast %cst_13 : f32 to vector<128x256xf32>
    %13 = arith.maximumf %11, %12 : vector<128x256xf32>
    %c0_14 = arith.constant 0 : index
    %c0_15 = arith.constant 0 : index
    %14 = vector.load %arg9[%c0_14, %c0_15] : memref<256x128xf32, #tpu.memory_space<vmem>>, vector<256x128xf32>
    %cst_16 = arith.constant dense<0.000000e+00> : vector<128x128xf32>
    %15 = tpu.matmul %13, %14, %cst_16 {dimension_numbers = #tpu.dot_dimension_numbers<[1], [0], [0], [1], [0, 0, 1, 1], [], []>} : vector<128x256xf32>, vector<256x128xf32>, vector<128x128xf32> -> vector<128x128xf32>
    %c0_17 = arith.constant 0 : index
    %c0_18 = arith.constant 0 : index
    %16 = vector.load %arg10[%c0_17, %c0_18] : memref<1x128xf32, #tpu.memory_space<vmem>>, vector<1x128xf32>
    %17 = vector.broadcast %16 : vector<1x128xf32> to vector<128x128xf32>
    %18 = arith.addf %15, %17 : vector<128x128xf32>
    %cst_19 = arith.constant 0.000000e+00 : f32
    %19 = vector.broadcast %cst_19 : f32 to vector<128x128xf32>
    %20 = arith.maximumf %18, %19 : vector<128x128xf32>
    %c0_20 = arith.constant 0 : index
    %c0_21 = arith.constant 0 : index
    %21 = vector.load %arg11[%c0_20, %c0_21] : memref<128x64xf32, #tpu.memory_space<vmem>>, vector<128x64xf32>
    %cst_22 = arith.constant dense<0.000000e+00> : vector<128x64xf32>
    %22 = tpu.matmul %20, %21, %cst_22 {dimension_numbers = #tpu.dot_dimension_numbers<[1], [0], [0], [1], [0, 0, 1, 1], [], []>} : vector<128x128xf32>, vector<128x64xf32>, vector<128x64xf32> -> vector<128x64xf32>
    %c0_23 = arith.constant 0 : index
    %c0_24 = arith.constant 0 : index
    %23 = vector.load %arg12[%c0_23, %c0_24] : memref<1x64xf32, #tpu.memory_space<vmem>>, vector<1x64xf32>
    %24 = vector.broadcast %23 : vector<1x64xf32> to vector<128x64xf32>
    %25 = arith.addf %22, %24 : vector<128x64xf32>
    %cst_25 = arith.constant 0.000000e+00 : f32
    %26 = vector.broadcast %cst_25 : f32 to vector<128x64xf32>
    %27 = arith.maximumf %25, %26 : vector<128x64xf32>
    %c0_26 = arith.constant 0 : index
    %c0_27 = arith.constant 0 : index
    %28 = vector.load %arg13[%c0_26, %c0_27] : memref<64x32xf32, #tpu.memory_space<vmem>>, vector<64x32xf32>
    %cst_28 = arith.constant dense<0.000000e+00> : vector<128x32xf32>
    %29 = tpu.matmul %27, %28, %cst_28 {dimension_numbers = #tpu.dot_dimension_numbers<[1], [0], [0], [1], [0, 0, 1, 1], [], []>} : vector<128x64xf32>, vector<64x32xf32>, vector<128x32xf32> -> vector<128x32xf32>
    %c0_29 = arith.constant 0 : index
    %c0_30 = arith.constant 0 : index
    %30 = vector.load %arg14[%c0_29, %c0_30] : memref<1x32xf32, #tpu.memory_space<vmem>>, vector<1x32xf32>
    %31 = vector.broadcast %30 : vector<1x32xf32> to vector<128x32xf32>
    %32 = arith.addf %29, %31 : vector<128x32xf32>
    %cst_31 = arith.constant 0.000000e+00 : f32
    %33 = vector.broadcast %cst_31 : f32 to vector<128x32xf32>
    %34 = arith.maximumf %32, %33 : vector<128x32xf32>
    %c0_32 = arith.constant 0 : index
    %c0_33 = arith.constant 0 : index
    %35 = vector.load %arg3[%c0_32, %c0_33] : memref<128x16xf32, #tpu.memory_space<vmem>>, vector<128x16xf32>
    %c0_34 = arith.constant 0 : index
    %c0_35 = arith.constant 0 : index
    %36 = vector.load %arg4[%c0_34, %c0_35] : memref<128x16xf32, #tpu.memory_space<vmem>>, vector<128x16xf32>
    %37 = arith.mulf %35, %36 : vector<128x16xf32>
    %c0_36 = arith.constant 0 : index
    %c0_37 = arith.constant 0 : index
    %38 = vector.load %arg15[%c0_36, %c0_37] : memref<8x16xf32, #tpu.memory_space<vmem>>, vector<8x16xf32>
    %cst_38 = arith.constant dense<0.000000e+00> : vector<8x128xf32>
    %39 = tpu.matmul %38, %37, %cst_38 {dimension_numbers = #tpu.dot_dimension_numbers<[1], [1], [0], [0], [0, 0, 1, 0], [], []>} : vector<8x16xf32>, vector<128x16xf32>, vector<8x128xf32> -> vector<8x128xf32>
    %c0_39 = arith.constant 0 : index
    %c0_40 = arith.constant 0 : index
    %40 = vector.load %arg16[%c0_39, %c0_40] : memref<8x32xf32, #tpu.memory_space<vmem>>, vector<8x32xf32>
    %cst_41 = arith.constant dense<0.000000e+00> : vector<8x128xf32>
    %41 = tpu.matmul %40, %34, %cst_41 {dimension_numbers = #tpu.dot_dimension_numbers<[1], [1], [0], [0], [0, 0, 1, 0], [], []>} : vector<8x32xf32>, vector<128x32xf32>, vector<8x128xf32> -> vector<8x128xf32>
    %42 = arith.addf %39, %41 : vector<8x128xf32>
    %43 = vector.extract_strided_slice %42 {offsets = [0, 0], sizes = [1, 128], strides = [1, 1]} : vector<8x128xf32> to vector<1x128xf32>
    %c0_42 = arith.constant 0 : index
    %c0_43 = arith.constant 0 : index
    %44 = vector.load %arg17[%c0_42, %c0_43] : memref<1x1xf32, #tpu.memory_space<vmem>>, vector<1x1xf32>
    %45 = vector.broadcast %44 : vector<1x1xf32> to vector<1x128xf32>
    %46 = arith.addf %43, %45 : vector<1x128xf32>
    %c0_44 = arith.constant 0 : index
    %c0_45 = arith.constant 0 : index
    %47 = vector.load %arg18[%c0_44, %c0_45] : memref<1x128xf32, #tpu.memory_space<vmem>>, vector<1x128xf32>
    tpu.vector_store %arg18[%c0_44, %c0_45], %46 {strides = array<i32>} : memref<1x128xf32, #tpu.memory_space<vmem>>, vector<1x128xf32>,
    return
  }
  func.func @transform_0(%arg0: i32) -> (i32, i32) {
    %c0_i32 = arith.constant 0 : i32
    %c0_i32_0 = arith.constant 0 : i32
    return %arg0, %c0_i32 : i32, i32
  }
  func.func @transform_1(%arg0: i32) -> (i32, i32) {
    %c0_i32 = arith.constant 0 : i32
    %c0_i32_0 = arith.constant 0 : i32
    return %arg0, %c0_i32 : i32, i32
  }
  func.func @transform_2(%arg0: i32) -> (i32, i32) {
    %c0_i32 = arith.constant 0 : i32
    %c0_i32_0 = arith.constant 0 : i32
    return %arg0, %c0_i32 : i32, i32
  }
  func.func @transform_3(%arg0: i32) -> (i32, i32) {
    %c0_i32 = arith.constant 0 : i32
    %c0_i32_0 = arith.constant 0 : i32
    return %arg0, %c0_i32 : i32, i32
  }
  func.func @transform_4(%arg0: i32) -> (i32, i32) {
    %c0_i32 = arith.constant 0 : i32
    %c0_i32_0 = arith.constant 0 : i32
    %c0_i32_1 = arith.constant 0 : i32
    return %c0_i32, %c0_i32_0 : i32, i32
  }
  func.func @transform_5(%arg0: i32) -> (i32, i32) {
    %c0_i32 = arith.constant 0 : i32
    %c0_i32_0 = arith.constant 0 : i32
    %c0_i32_1 = arith.constant 0 : i32
    return %c0_i32, %c0_i32_0 : i32, i32
  }
  func.func @transform_6(%arg0: i32) -> (i32, i32) {
    %c0_i32 = arith.constant 0 : i32
    %c0_i32_0 = arith.constant 0 : i32
    %c0_i32_1 = arith.constant 0 : i32
    return %c0_i32, %c0_i32_0 : i32, i32
  }
  func.func @transform_7(%arg0: i32) -> (i32, i32) {
    %c0_i32 = arith.constant 0 : i32
    %c0_i32_0 = arith.constant 0 : i32
    %c0_i32_1 = arith.constant 0 : i32
    return %c0_i32, %c0_i32_0 : i32, i32
  }
  func.func @transform_8(%arg0: i32) -> (i32, i32) {
    %c0_i32 = arith.constant 0 : i32
    %c0_i32_0 = arith.constant 0 : i32
    %c0_i32_1 = arith.constant 0 : i32
    return %c0_i32, %c0_i32_0 : i32, i32
  }
  func.func @transform_9(%arg0: i32) -> (i32, i32) {
    %c0_i32 = arith.constant 0 : i32
    %c0_i32_0 = arith.constant 0 : i32
    %c0_i32_1 = arith.constant 0 : i32
    return %c0_i32, %c0_i32_0 : i32, i32
  }
  func.func @transform_10(%arg0: i32) -> (i32, i32) {
    %c0_i32 = arith.constant 0 : i32
    %c0_i32_0 = arith.constant 0 : i32
    %c0_i32_1 = arith.constant 0 : i32
    return %c0_i32, %c0_i32_0 : i32, i32
  }
  func.func @transform_11(%arg0: i32) -> (i32, i32) {
    %c0_i32 = arith.constant 0 : i32
    %c0_i32_0 = arith.constant 0 : i32
    %c0_i32_1 = arith.constant 0 : i32
    return %c0_i32, %c0_i32_0 : i32, i32
  }
  func.func @transform_12(%arg0: i32) -> (i32, i32) {
    %c0_i32 = arith.constant 0 : i32
    %c0_i32_0 = arith.constant 0 : i32
    %c0_i32_1 = arith.constant 0 : i32
    return %c0_i32, %c0_i32_0 : i32, i32
  }
  func.func @transform_13(%arg0: i32) -> (i32, i32) {
    %c0_i32 = arith.constant 0 : i32
    %c0_i32_0 = arith.constant 0 : i32
    %c0_i32_1 = arith.constant 0 : i32
    return %c0_i32, %c0_i32_0 : i32, i32
  }
  func.func @transform_14(%arg0: i32) -> (i32, i32) {
    %c0_i32 = arith.constant 0 : i32
    %c0_i32_0 = arith.constant 0 : i32
    %c0_i32_1 = arith.constant 0 : i32
    return %c0_i32, %c0_i32_0 : i32, i32
  }
  func.func @transform_15(%arg0: i32) -> (i32, i32) {
    %c0_i32 = arith.constant 0 : i32
    %c0_i32_0 = arith.constant 0 : i32
    %c0_i32_1 = arith.constant 0 : i32
    return %c0_i32, %c0_i32_0 : i32, i32
  }
  func.func @transform_16(%arg0: i32) -> (i32, i32) {
    %c0_i32 = arith.constant 0 : i32
    %c0_i32_0 = arith.constant 0 : i32
    %c0_i32_1 = arith.constant 0 : i32
    return %c0_i32, %c0_i32_0 : i32, i32
  }
  func.func @transform_17(%arg0: i32) -> (i32, i32) {
    %c0_i32 = arith.constant 0 : i32
    %c0_i32_0 = arith.constant 0 : i32
    return %c0_i32, %arg0 : i32, i32
  }
}

</mosaic_0001>

<llo_original>
// kernel: oncf_forward.1
$region0: #{oncf_forward.1}
  #allocation0 [shape = 'u32[]', space=smem, size = 0x4, offset = 0x4, fixed_abs, tag = 'smem constant byte address 0x4 - core index']
  #allocation1 [shape = 'u32[144,128]{1,0:T(1,128)}', space=vmem, size = 0x12000, scoped, tag = 'internal scratch']
  #allocation2 [shape = 'f32[1,1]{1,0:T(1,128)S(1)}', space=vmem, size = 0x200, scoped, tag = 'scoped memory for oncf_forward.1']
  %s0 = inlined_call_operand.vmem [shape: f32[128,16], index: 0, kind: input, shape index: {}]
  %s1 = inlined_call_operand.vmem [shape: f32[128,16], index: 1, kind: input, shape index: {}]
  %s2 = inlined_call_operand.vmem [shape: f32[128,16], index: 2, kind: input, shape index: {}]
  %s3 = inlined_call_operand.vmem [shape: f32[128,16], index: 3, kind: input, shape index: {}]
  %s4 = inlined_call_operand.vmem [shape: f32[16,256], index: 4, kind: input, shape index: {}]
  %s5 = inlined_call_operand.vmem [shape: f32[16,256], index: 5, kind: input, shape index: {}]
  %s6 = inlined_call_operand.vmem [shape: f32[256,256], index: 6, kind: input, shape index: {}]
  %s7 = inlined_call_operand.vmem [shape: f32[1,256], index: 7, kind: input, shape index: {}]
  %s8 = inlined_call_operand.vmem [shape: f32[256,128], index: 8, kind: input, shape index: {}]
  %s9 = inlined_call_operand.vmem [shape: f32[1,128], index: 9, kind: input, shape index: {}]
  %s10 = inlined_call_operand.vmem [shape: f32[128,64], index: 10, kind: input, shape index: {}]
  %s11 = inlined_call_operand.vmem [shape: f32[1,64], index: 11, kind: input, shape index: {}]
  %s12 = inlined_call_operand.vmem [shape: f32[64,32], index: 12, kind: input, shape index: {}]
  %s13 = inlined_call_operand.vmem [shape: f32[1,32], index: 13, kind: input, shape index: {}]
  %s14 = inlined_call_operand.vmem [shape: f32[8,16], index: 14, kind: input, shape index: {}]
  %s15 = inlined_call_operand.vmem [shape: f32[8,32], index: 15, kind: input, shape index: {}]
  %s16 = inlined_call_operand.<no memory space> [shape: f32[1,1], index: 16, kind: input, shape index: {}]
  %s17 = inlined_call_operand.vmem [shape: f32[1,128], index: 17, kind: output, shape index: {}]
  %s18 = sld [smem:[#allocation0]]
  $region78: #{oncf_forward.1} parent=0
    _
  %s20 = ssub.s32 1, %s18
  %s21 = scalar_select 0, %s20, %s18
  %v22 = vstv %s16
  %23 = vst [vmem:[#allocation2] sm:$0x1] %v22
  // Predicated region
  $region2: #{oncf_forward.1} parent=0 // pred_check
    _
  $region3: #{oncf_forward.1} parent=0 // pred_check_branch
    %25 = sbr.rel (0) target = $region5
  $region4: #{oncf_forward.1} parent=0 // pred_region
    _
  $region5: #{oncf_forward.1} parent=0 // pred_fallthru
    _
  // Predicated region
  $region6: #{oncf_forward.1} parent=0 // pred_check
    _
  $region7: #{oncf_forward.1} parent=0 // pred_check_branch
    %27 = sbr.rel (0) target = $region9
  $region8: #{oncf_forward.1} parent=0 // pred_region
    _
  $region9: #{oncf_forward.1} parent=0 // pred_fallthru
    _
  // Predicated region
  $region10: #{oncf_forward.1} parent=0 // pred_check
    _
  $region11: #{oncf_forward.1} parent=0 // pred_check_branch
    %29 = sbr.rel (0) target = $region13
  $region12: #{oncf_forward.1} parent=0 // pred_region
    _
  $region13: #{oncf_forward.1} parent=0 // pred_fallthru
    _
  // Predicated region
  $region14: #{oncf_forward.1} parent=0 // pred_check
    _
  $region15: #{oncf_forward.1} parent=0 // pred_check_branch
    %31 = sbr.rel (0) target = $region17
  $region16: #{oncf_forward.1} parent=0 // pred_region
    _
  $region17: #{oncf_forward.1} parent=0 // pred_fallthru
    _
  // Predicated region
  $region18: #{oncf_forward.1} parent=0 // pred_check
    _
  $region19: #{oncf_forward.1} parent=0 // pred_check_branch
    %33 = sbr.rel (0) target = $region21
  $region20: #{oncf_forward.1} parent=0 // pred_region
    _
  $region21: #{oncf_forward.1} parent=0 // pred_fallthru
    _
  // Predicated region
  $region22: #{oncf_forward.1} parent=0 // pred_check
    _
  $region23: #{oncf_forward.1} parent=0 // pred_check_branch
    %35 = sbr.rel (0) target = $region25
  $region24: #{oncf_forward.1} parent=0 // pred_region
    _
  $region25: #{oncf_forward.1} parent=0 // pred_fallthru
    _
  // Predicated region
  $region26: #{oncf_forward.1} parent=0 // pred_check
    _
  $region27: #{oncf_forward.1} parent=0 // pred_check_branch
    %37 = sbr.rel (0) target = $region29
  $region28: #{oncf_forward.1} parent=0 // pred_region
    _
  $region29: #{oncf_forward.1} parent=0 // pred_fallthru
    _
  // Predicated region
  $region30: #{oncf_forward.1} parent=0 // pred_check
    _
  $region31: #{oncf_forward.1} parent=0 // pred_check_branch
    %39 = sbr.rel (0) target = $region33
  $region32: #{oncf_forward.1} parent=0 // pred_region
    _
  $region33: #{oncf_forward.1} parent=0 // pred_fallthru
    _
  // Predicated region
  $region34: #{oncf_forward.1} parent=0 // pred_check
    _
  $region35: #{oncf_forward.1} parent=0 // pred_check_branch
    %41 = sbr.rel (0) target = $region37
  $region36: #{oncf_forward.1} parent=0 // pred_region
    _
  $region37: #{oncf_forward.1} parent=0 // pred_fallthru
    _
  // Predicated region
  $region38: #{oncf_forward.1} parent=0 // pred_check
    _
  $region39: #{oncf_forward.1} parent=0 // pred_check_branch
    %43 = sbr.rel (0) target = $region41
  $region40: #{oncf_forward.1} parent=0 // pred_region
    _
  $region41: #{oncf_forward.1} parent=0 // pred_fallthru
    _
  // Predicated region
  $region42: #{oncf_forward.1} parent=0 // pred_check
    _
  $region43: #{oncf_forward.1} parent=0 // pred_check_branch
    %45 = sbr.rel (0) target = $region45
  $region44: #{oncf_forward.1} parent=0 // pred_region
    _
  $region45: #{oncf_forward.1} parent=0 // pred_fallthru
    _
  // Predicated region
  $region46: #{oncf_forward.1} parent=0 // pred_check
    _
  $region47: #{oncf_forward.1} parent=0 // pred_check_branch
    %47 = sbr.rel (0) target = $region49
  $region48: #{oncf_forward.1} parent=0 // pred_region
    _
  $region49: #{oncf_forward.1} parent=0 // pred_fallthru
    _
  // Predicated region
  $region50: #{oncf_forward.1} parent=0 // pred_check
    _
  $region51: #{oncf_forward.1} parent=0 // pred_check_branch
    %49 = sbr.rel (0) target = $region53
  $region52: #{oncf_forward.1} parent=0 // pred_region
    _
  $region53: #{oncf_forward.1} parent=0 // pred_fallthru
    _
  // Predicated region
  $region54: #{oncf_forward.1} parent=0 // pred_check
    _
  $region55: #{oncf_forward.1} parent=0 // pred_check_branch
    %51 = sbr.rel (0) target = $region57
  $region56: #{oncf_forward.1} parent=0 // pred_region
    _
  $region57: #{oncf_forward.1} parent=0 // pred_fallthru
    _
  // Predicated region
  $region58: #{oncf_forward.1} parent=0 // pred_check
    _
  $region59: #{oncf_forward.1} parent=0 // pred_check_branch
    %53 = sbr.rel (0) target = $region61
  $region60: #{oncf_forward.1} parent=0 // pred_region
    _
  $region61: #{oncf_forward.1} parent=0 // pred_fallthru
    _
  // Predicated region
  $region62: #{oncf_forward.1} parent=0 // pred_check
    _
  $region63: #{oncf_forward.1} parent=0 // pred_check_branch
    %55 = sbr.rel (0) target = $region65
  $region64: #{oncf_forward.1} parent=0 // pred_region
    _
  $region65: #{oncf_forward.1} parent=0 // pred_fallthru
    _
  // Predicated region
  $region66: #{oncf_forward.1} parent=0 // pred_check
    _
  $region67: #{oncf_forward.1} parent=0 // pred_check_branch
    %57 = sbr.rel (0) target = $region69
  $region68: #{oncf_forward.1} parent=0 // pred_region
    _
  $region69: #{oncf_forward.1} parent=0 // pred_fallthru
    _
  %v58 = vld [vmem:[%s0] sm:$0xff]
  %v59 = vld [vmem:[%s0 + $0x8] sm:$0xff]
  %v60 = vld [vmem:[%s0 + $0x10] sm:$0xff]
  %v61 = vld [vmem:[%s0 + $0x18] sm:$0xff]
  %v62 = vld [vmem:[%s0 + $0x20] sm:$0xff]
  %v63 = vld [vmem:[%s0 + $0x28] sm:$0xff]
  %v64 = vld [vmem:[%s0 + $0x30] sm:$0xff]
  %v65 = vld [vmem:[%s0 + $0x38] sm:$0xff]
  %v66 = vld [vmem:[%s0 + $0x40] sm:$0xff]
  %v67 = vld [vmem:[%s0 + $0x48] sm:$0xff]
  %v68 = vld [vmem:[%s0 + $0x50] sm:$0xff]
  %v69 = vld [vmem:[%s0 + $0x58] sm:$0xff]
  %v70 = vld [vmem:[%s0 + $0x60] sm:$0xff]
  %v71 = vld [vmem:[%s0 + $0x68] sm:$0xff]
  %v72 = vld [vmem:[%s0 + $0x70] sm:$0xff]
  %v73 = vld [vmem:[%s0 + $0x78] sm:$0xff]
  %v74 = vld [vmem:[%s4] sm:$0xff]
  %v75 = vld [vmem:[%s4 + $0x8] sm:$0xff]
  %v76 = vld [vmem:[%s4 + $0x10] sm:$0xff]
  %v77 = vld [vmem:[%s4 + $0x18] sm:$0xff]
  %vm78 = vcmask 130048
  %v80 = vsel %vm78, %v58, 0
  %v83 = vsel %vm78, %v59, 0
  %v86 = vsel %vm78, %v60, 0
  %v89 = vsel %vm78, %v61, 0
  %v92 = vsel %vm78, %v62, 0
  %v95 = vsel %vm78, %v63, 0
  %v98 = vsel %vm78, %v64, 0
  %v101 = vsel %vm78, %v65, 0
  %v104 = vsel %vm78, %v66, 0
  %v107 = vsel %vm78, %v67, 0
  %v110 = vsel %vm78, %v68, 0
  %v113 = vsel %vm78, %v69, 0
  %v116 = vsel %vm78, %v70, 0
  %v119 = vsel %vm78, %v71, 0
  %v122 = vsel %vm78, %v72, 0
  %v125 = vsel %vm78, %v73, 0
  %127 = vmatprep.subr.mxu0 %v75
  %128 = vmatpush1.msra.mxu0 %v74
  %129 = vmatprep.subr.mxu0 %v77
  %130 = vmatpush1.msra.mxu0 %v76
  %131 = vmatprep.subr.mxu0 0.0
  %132 = vmatpush1.msra.mxu0 0.0
  %133 = vmatprep.subr.mxu0 0.0
  %134 = vmatpush1.msra.mxu0 0.0
  %135 = vmatprep.subr.mxu0 0.0
  %136 = vmatpush1.msra.mxu0 0.0
  %137 = vmatprep.subr.mxu0 0.0
  %138 = vmatpush1.msra.mxu0 0.0
  %139 = vmatprep.subr.mxu0 0.0
  %140 = vmatpush1.msra.mxu0 0.0
  %141 = vmatprep.subr.mxu0 0.0
  %142 = vmatpush1.msra.mxu0 0.0
  %143 = vmatprep.subr.mxu0 0.0
  %144 = vmatpush1.msra.mxu0 0.0
  %145 = vmatprep.subr.mxu0 0.0
  %146 = vmatpush1.msra.mxu0 0.0
  %147 = vmatprep.subr.mxu0 0.0
  %148 = vmatpush1.msra.mxu0 0.0
  %149 = vmatprep.subr.mxu0 0.0
  %150 = vmatpush1.msra.mxu0 0.0
  %151 = vmatprep.subr.mxu0 0.0
  %152 = vmatpush1.msra.mxu0 0.0
  %153 = vmatprep.subr.mxu0 0.0
  %154 = vmatpush1.msra.mxu0 0.0
  %155 = vmatprep.subr.mxu0 0.0
  %156 = vmatpush1.msra.mxu0 0.0
  %157 = vmatprep.subr.mxu0 0.0
  %158 = vmatpush1.msra.mxu0 0.0
  %159 = vmatprep.subr.mxu0 0.0
  %160 = vmatpush1.msra.mxu0 0.0
  %161 = vmatprep.subr.mxu0 0.0
  %162 = vmatpush1.msra.mxu0 0.0
  %163 = vmatprep.subr.mxu0 0.0
  %164 = vmatpush1.msra.mxu0 0.0
  %165 = vmatprep.subr.mxu0 0.0
  %166 = vmatpush1.msra.mxu0 0.0
  %167 = vmatprep.subr.mxu0 0.0
  %168 = vmatpush1.msra.mxu0 0.0
  %169 = vmatprep.subr.mxu0 0.0
  %170 = vmatpush1.msra.mxu0 0.0
  %171 = vmatprep.subr.mxu0 0.0
  %172 = vmatpush1.msra.mxu0 0.0
  %173 = vmatprep.subr.mxu0 0.0
  %174 = vmatpush1.msra.mxu0 0.0
  %175 = vmatprep.subr.mxu0 0.0
  %176 = vmatpush1.msra.mxu0 0.0
  %177 = vmatprep.subr.mxu0 0.0
  %178 = vmatpush1.msra.mxu0 0.0
  %179 = vmatprep.subr.mxu0 0.0
  %180 = vmatpush1.msra.mxu0 0.0
  %181 = vmatprep.subr.mxu0 0.0
  %182 = vmatpush1.msra.mxu0 0.0
  %183 = vmatprep.subr.mxu0 0.0
  %184 = vmatpush1.msra.mxu0 0.0
  %185 = vmatprep.subr.mxu0 0.0
  %186 = vmatpush1.msra.mxu0 0.0
  %187 = vmatprep.subr.mxu0 0.0
  %188 = vmatpush1.msra.mxu0 0.0
  %189 = vmatprep.subr.mxu0 0.0
  %190 = vmatpush1.msra.mxu0 0.0
  %191 = vmatprep.mubr.f32.mxu0 0.0
  %192 = vmatmul.mubr.f32.gmra.mrb[0].mxu0 %v80
  %v193 = vpop.f32.mrb[0].mxu0
  %v194 = vadd.f32 0.0, %v193
  %v195 = vpop.f32.mrb[0].mxu0
  %v196 = vadd.f32 0.0, %v195
  %197 = vmatprep.mubr.f32.mxu0 0.0
  %198 = vmatmul.mubr.f32.gmra.mrb[0].mxu0 %v83
  %v199 = vpop.f32.mrb[0].mxu0
  %v200 = vadd.f32 0.0, %v199
  %v201 = vpop.f32.mrb[0].mxu0
  %v202 = vadd.f32 0.0, %v201
  %203 = vmatprep.mubr.f32.mxu0 0.0
  %204 = vmatmul.mubr.f32.gmra.mrb[0].mxu0 %v86
  %v205 = vpop.f32.mrb[0].mxu0
  %v206 = vadd.f32 0.0, %v205
  %v207 = vpop.f32.mrb[0].mxu0
  %v208 = vadd.f32 0.0, %v207
  %209 = vmatprep.mubr.f32.mxu0 0.0
  %210 = vmatmul.mubr.f32.gmra.mrb[0].mxu0 %v89
  %v211 = vpop.f32.mrb[0].mxu0
  %v212 = vadd.f32 0.0, %v211
  %v213 = vpop.f32.mrb[0].mxu0
  %v214 = vadd.f32 0.0, %v213
  %215 = vmatprep.mubr.f32.mxu0 0.0
  %216 = vmatmul.mubr.f32.gmra.mrb[0].mxu0 %v92
  %v217 = vpop.f32.mrb[0].mxu0
  %v218 = vadd.f32 0.0, %v217
  %v219 = vpop.f32.mrb[0].mxu0
  %v220 = vadd.f32 0.0, %v219
  %221 = vmatprep.mubr.f32.mxu0 0.0
  %222 = vmatmul.mubr.f32.gmra.mrb[0].mxu0 %v95
  %v223 = vpop.f32.mrb[0].mxu0
  %v224 = vadd.f32 0.0, %v223
  %v225 = vpop.f32.mrb[0].mxu0
  %v226 = vadd.f32 0.0, %v225
  %227 = vmatprep.mubr.f32.mxu0 0.0
  %228 = vmatmul.mubr.f32.gmra.mrb[0].mxu0 %v98
  %v229 = vpop.f32.mrb[0].mxu0
  %v230 = vadd.f32 0.0, %v229
  %v231 = vpop.f32.mrb[0].mxu0
  %v232 = vadd.f32 0.0, %v231
  %233 = vmatprep.mubr.f32.mxu0 0.0
  %234 = vmatmul.mubr.f32.gmra.mrb[0].mxu0 %v101
  %v235 = vpop.f32.mrb[0].mxu0
  %v236 = vadd.f32 0.0, %v235
  %v237 = vpop.f32.mrb[0].mxu0
  %v238 = vadd.f32 0.0, %v237
  %239 = vmatprep.mubr.f32.mxu0 0.0
  %240 = vmatmul.mubr.f32.gmra.mrb[0].mxu0 %v104
  %v241 = vpop.f32.mrb[0].mxu0
  %v242 = vadd.f32 0.0, %v241
  %v243 = vpop.f32.mrb[0].mxu0
  %v244 = vadd.f32 0.0, %v243
  %245 = vmatprep.mubr.f32.mxu0 0.0
  %246 = vmatmul.mubr.f32.gmra.mrb[0].mxu0 %v107
  %v247 = vpop.f32.mrb[0].mxu0
  %v248 = vadd.f32 0.0, %v247
  %v249 = vpop.f32.mrb[0].mxu0
  %v250 = vadd.f32 0.0, %v249
  %251 = vmatprep.mubr.f32.mxu0 0.0
  %252 = vmatmul.mubr.f32.gmra.mrb[0].mxu0 %v110
  %v253 = vpop.f32.mrb[0].mxu0
  %v254 = vadd.f32 0.0, %v253
  %v255 = vpop.f32.mrb[0].mxu0
  %v256 = vadd.f32 0.0, %v255
  %257 = vmatprep.mubr.f32.mxu0 0.0
  %258 = vmatmul.mubr.f32.gmra.mrb[0].mxu0 %v113
  %v259 = vpop.f32.mrb[0].mxu0
  %v260 = vadd.f32 0.0, %v259
  %v261 = vpop.f32.mrb[0].mxu0
  %v262 = vadd.f32 0.0, %v261
  %263 = vmatprep.mubr.f32.mxu0 0.0
  %264 = vmatmul.mubr.f32.gmra.mrb[0].mxu0 %v116
  %v265 = vpop.f32.mrb[0].mxu0
  %v266 = vadd.f32 0.0, %v265
  %v267 = vpop.f32.mrb[0].mxu0
  %v268 = vadd.f32 0.0, %v267
  %269 = vmatprep.mubr.f32.mxu0 0.0
  %270 = vmatmul.mubr.f32.gmra.mrb[0].mxu0 %v119
  %v271 = vpop.f32.mrb[0].mxu0
  %v272 = vadd.f32 0.0, %v271
  %v273 = vpop.f32.mrb[0].mxu0
  %v274 = vadd.f32 0.0, %v273
  %275 = vmatprep.mubr.f32.mxu0 0.0
  %276 = vmatmul.mubr.f32.gmra.mrb[0].mxu0 %v122
  %v277 = vpop.f32.mrb[0].mxu0
  %v278 = vadd.f32 0.0, %v277
  %v279 = vpop.f32.mrb[0].mxu0
  %v280 = vadd.f32 0.0, %v279
  %281 = vmatprep.mubr.f32.mxu0 0.0
  %282 = vmatmul.mubr.f32.gmra.mrb[0].mxu0 %v125
  %v283 = vpop.f32.mrb[0].mxu0
  %v284 = vadd.f32 0.0, %v283
  %v285 = vpop.f32.mrb[0].mxu0
  %v286 = vadd.f32 0.0, %v285
  %287 = vdwg.mxu0
  %v288 = vld [vmem:[%s1] sm:$0xff]
  %v289 = vld [vmem:[%s1 + $0x8] sm:$0xff]
  %v290 = vld [vmem:[%s1 + $0x10] sm:$0xff]
  %v291 = vld [vmem:[%s1 + $0x18] sm:$0xff]
  %v292 = vld [vmem:[%s1 + $0x20] sm:$0xff]
  %v293 = vld [vmem:[%s1 + $0x28] sm:$0xff]
  %v294 = vld [vmem:[%s1 + $0x30] sm:$0xff]
  %v295 = vld [vmem:[%s1 + $0x38] sm:$0xff]
  %v296 = vld [vmem:[%s1 + $0x40] sm:$0xff]
  %v297 = vld [vmem:[%s1 + $0x48] sm:$0xff]
  %v298 = vld [vmem:[%s1 + $0x50] sm:$0xff]
  %v299 = vld [vmem:[%s1 + $0x58] sm:$0xff]
  %v300 = vld [vmem:[%s1 + $0x60] sm:$0xff]
  %v301 = vld [vmem:[%s1 + $0x68] sm:$0xff]
  %v302 = vld [vmem:[%s1 + $0x70] sm:$0xff]
  %v303 = vld [vmem:[%s1 + $0x78] sm:$0xff]
  %v304 = vld [vmem:[%s5] sm:$0xff]
  %v305 = vld [vmem:[%s5 + $0x8] sm:$0xff]
  %v306 = vld [vmem:[%s5 + $0x10] sm:$0xff]
  %v307 = vld [vmem:[%s5 + $0x18] sm:$0xff]
  %v309 = vsel %vm78, %v288, 0
  %v312 = vsel %vm78, %v289, 0
  %v315 = vsel %vm78, %v290, 0
  %v318 = vsel %vm78, %v291, 0
  %v321 = vsel %vm78, %v292, 0
  %v324 = vsel %vm78, %v293, 0
  %v327 = vsel %vm78, %v294, 0
  %v330 = vsel %vm78, %v295, 0
  %v333 = vsel %vm78, %v296, 0
  %v336 = vsel %vm78, %v297, 0
  %v339 = vsel %vm78, %v298, 0
  %v342 = vsel %vm78, %v299, 0
  %v345 = vsel %vm78, %v300, 0
  %v348 = vsel %vm78, %v301, 0
  %v351 = vsel %vm78, %v302, 0
  %v354 = vsel %vm78, %v303, 0
  %356 = vmatprep.subr.mxu0 %v305
  %357 = vmatpush1.msra.mxu0 %v304
  %358 = vmatprep.subr.mxu0 %v307
  %359 = vmatpush1.msra.mxu0 %v306
  %360 = vmatprep.subr.mxu0 0.0
  %361 = vmatpush1.msra.mxu0 0.0
  %362 = vmatprep.subr.mxu0 0.0
  %363 = vmatpush1.msra.mxu0 0.0
  %364 = vmatprep.subr.mxu0 0.0
  %365 = vmatpush1.msra.mxu0 0.0
  %366 = vmatprep.subr.mxu0 0.0
  %367 = vmatpush1.msra.mxu0 0.0
  %368 = vmatprep.subr.mxu0 0.0
  %369 = vmatpush1.msra.mxu0 0.0
  %370 = vmatprep.subr.mxu0 0.0
  %371 = vmatpush1.msra.mxu0 0.0
  %372 = vmatprep.subr.mxu0 0.0
  %373 = vmatpush1.msra.mxu0 0.0
  %374 = vmatprep.subr.mxu0 0.0
  %375 = vmatpush1.msra.mxu0 0.0
  %376 = vmatprep.subr.mxu0 0.0
  %377 = vmatpush1.msra.mxu0 0.0
  %378 = vmatprep.subr.mxu0 0.0
  %379 = vmatpush1.msra.mxu0 0.0
  %380 = vmatprep.subr.mxu0 0.0
  %381 = vmatpush1.msra.mxu0 0.0
  %382 = vmatprep.subr.mxu0 0.0
  %383 = vmatpush1.msra.mxu0 0.0
  %384 = vmatprep.subr.mxu0 0.0
  %385 = vmatpush1.msra.mxu0 0.0
  %386 = vmatprep.subr.mxu0 0.0
  %387 = vmatpush1.msra.mxu0 0.0
  %388 = vmatprep.subr.mxu0 0.0
  %389 = vmatpush1.msra.mxu0 0.0
  %390 = vmatprep.subr.mxu0 0.0
  %391 = vmatpush1.msra.mxu0 0.0
  %392 = vmatprep.subr.mxu0 0.0
  %393 = vmatpush1.msra.mxu0 0.0
  %394 = vmatprep.subr.mxu0 0.0
  %395 = vmatpush1.msra.mxu0 0.0
  %396 = vmatprep.subr.mxu0 0.0
  %397 = vmatpush1.msra.mxu0 0.0
  %398 = vmatprep.subr.mxu0 0.0
  %399 = vmatpush1.msra.mxu0 0.0
  %400 = vmatprep.subr.mxu0 0.0
  %401 = vmatpush1.msra.mxu0 0.0
  %402 = vmatprep.subr.mxu0 0.0
  %403 = vmatpush1.msra.mxu0 0.0
  %404 = vmatprep.subr.mxu0 0.0
  %405 = vmatpush1.msra.mxu0 0.0
  %406 = vmatprep.subr.mxu0 0.0
  %407 = vmatpush1.msra.mxu0 0.0
  %408 = vmatprep.subr.mxu0 0.0
  %409 = vmatpush1.msra.mxu0 0.0
  %410 = vmatprep.subr.mxu0 0.0
  %411 = vmatpush1.msra.mxu0 0.0
  %412 = vmatprep.subr.mxu0 0.0
  %413 = vmatpush1.msra.mxu0 0.0
  %414 = vmatprep.subr.mxu0 0.0
  %415 = vmatpush1.msra.mxu0 0.0
  %416 = vmatprep.subr.mxu0 0.0
  %417 = vmatpush1.msra.mxu0 0.0
  %418 = vmatprep.subr.mxu0 0.0
  %419 = vmatpush1.msra.mxu0 0.0
  %420 = vmatprep.mubr.f32.mxu0 0.0
  %421 = vmatmul.mubr.f32.gmra.mrb[0].mxu0 %v309
  %v422 = vpop.f32.mrb[0].mxu0
  %v423 = vadd.f32 0.0, %v422
  %v424 = vpop.f32.mrb[0].mxu0
  %v425 = vadd.f32 0.0, %v424
  %426 = vmatprep.mubr.f32.mxu0 0.0
  %427 = vmatmul.mubr.f32.gmra.mrb[0].mxu0 %v312
  %v428 = vpop.f32.mrb[0].mxu0
  %v429 = vadd.f32 0.0, %v428
  %v430 = vpop.f32.mrb[0].mxu0
  %v431 = vadd.f32 0.0, %v430
  %432 = vmatprep.mubr.f32.mxu0 0.0
  %433 = vmatmul.mubr.f32.gmra.mrb[0].mxu0 %v315
  %v434 = vpop.f32.mrb[0].mxu0
  %v435 = vadd.f32 0.0, %v434
  %v436 = vpop.f32.mrb[0].mxu0
  %v437 = vadd.f32 0.0, %v436
  %438 = vmatprep.mubr.f32.mxu0 0.0
  %439 = vmatmul.mubr.f32.gmra.mrb[0].mxu0 %v318
  %v440 = vpop.f32.mrb[0].mxu0
  %v441 = vadd.f32 0.0, %v440
  %v442 = vpop.f32.mrb[0].mxu0
  %v443 = vadd.f32 0.0, %v442
  %444 = vmatprep.mubr.f32.mxu0 0.0
  %445 = vmatmul.mubr.f32.gmra.mrb[0].mxu0 %v321
  %v446 = vpop.f32.mrb[0].mxu0
  %v447 = vadd.f32 0.0, %v446
  %v448 = vpop.f32.mrb[0].mxu0
  %v449 = vadd.f32 0.0, %v448
  %450 = vmatprep.mubr.f32.mxu0 0.0
  %451 = vmatmul.mubr.f32.gmra.mrb[0].mxu0 %v324
  %v452 = vpop.f32.mrb[0].mxu0
  %v453 = vadd.f32 0.0, %v452
  %v454 = vpop.f32.mrb[0].mxu0
  %v455 = vadd.f32 0.0, %v454
  %456 = vmatprep.mubr.f32.mxu0 0.0
  %457 = vmatmul.mubr.f32.gmra.mrb[0].mxu0 %v327
  %v458 = vpop.f32.mrb[0].mxu0
  %v459 = vadd.f32 0.0, %v458
  %v460 = vpop.f32.mrb[0].mxu0
  %v461 = vadd.f32 0.0, %v460
  %462 = vmatprep.mubr.f32.mxu0 0.0
  %463 = vmatmul.mubr.f32.gmra.mrb[0].mxu0 %v330
  %v464 = vpop.f32.mrb[0].mxu0
  %v465 = vadd.f32 0.0, %v464
  %v466 = vpop.f32.mrb[0].mxu0
  %v467 = vadd.f32 0.0, %v466
  %468 = vmatprep.mubr.f32.mxu0 0.0
  %469 = vmatmul.mubr.f32.gmra.mrb[0].mxu0 %v333
  %v470 = vpop.f32.mrb[0].mxu0
  %v471 = vadd.f32 0.0, %v470
  %v472 = vpop.f32.mrb[0].mxu0
  %v473 = vadd.f32 0.0, %v472
  %474 = vmatprep.mubr.f32.mxu0 0.0
  %475 = vmatmul.mubr.f32.gmra.mrb[0].mxu0 %v336
  %v476 = vpop.f32.mrb[0].mxu0
  %v477 = vadd.f32 0.0, %v476
  %v478 = vpop.f32.mrb[0].mxu0
  %v479 = vadd.f32 0.0, %v478
  %480 = vmatprep.mubr.f32.mxu0 0.0
  %481 = vmatmul.mubr.f32.gmra.mrb[0].mxu0 %v339
  %v482 = vpop.f32.mrb[0].mxu0
  %v483 = vadd.f32 0.0, %v482
  %v484 = vpop.f32.mrb[0].mxu0
  %v485 = vadd.f32 0.0, %v484
  %486 = vmatprep.mubr.f32.mxu0 0.0
  %487 = vmatmul.mubr.f32.gmra.mrb[0].mxu0 %v342
  %v488 = vpop.f32.mrb[0].mxu0
  %v489 = vadd.f32 0.0, %v488
  %v490 = vpop.f32.mrb[0].mxu0
  %v491 = vadd.f32 0.0, %v490
  %492 = vmatprep.mubr.f32.mxu0 0.0
  %493 = vmatmul.mubr.f32.gmra.mrb[0].mxu0 %v345
  %v494 = vpop.f32.mrb[0].mxu0
  %v495 = vadd.f32 0.0, %v494
  %v496 = vpop.f32.mrb[0].mxu0
  %v497 = vadd.f32 0.0, %v496
  %498 = vmatprep.mubr.f32.mxu0 0.0
  %499 = vmatmul.mubr.f32.gmra.mrb[0].mxu0 %v348
  %v500 = vpop.f32.mrb[0].mxu0
  %v501 = vadd.f32 0.0, %v500
  %v502 = vpop.f32.mrb[0].mxu0
  %v503 = vadd.f32 0.0, %v502
  %504 = vmatprep.mubr.f32.mxu0 0.0
  %505 = vmatmul.mubr.f32.gmra.mrb[0].mxu0 %v351
  %v506 = vpop.f32.mrb[0].mxu0
  %v507 = vadd.f32 0.0, %v506
  %v508 = vpop.f32.mrb[0].mxu0
  %v509 = vadd.f32 0.0, %v508
  %510 = vmatprep.mubr.f32.mxu0 0.0
  %511 = vmatmul.mubr.f32.gmra.mrb[0].mxu0 %v354
  %v512 = vpop.f32.mrb[0].mxu0
  %v513 = vadd.f32 0.0, %v512
  %v514 = vpop.f32.mrb[0].mxu0
  %v515 = vadd.f32 0.0, %v514
  %516 = vdwg.mxu0
  %v517 = vmul.f32 %v194, %v423
  %v518 = vmul.f32 %v196, %v425
  %v519 = vmul.f32 %v200, %v429
  %v520 = vmul.f32 %v202, %v431
  %v521 = vmul.f32 %v206, %v435
  %v522 = vmul.f32 %v208, %v437
  %v523 = vmul.f32 %v212, %v441
  %v524 = vmul.f32 %v214, %v443
  %v525 = vmul.f32 %v218, %v447
  %v526 = vmul.f32 %v220, %v449
  %v527 = vmul.f32 %v224, %v453
  %v528 = vmul.f32 %v226, %v455
  %v529 = vmul.f32 %v230, %v459
  %v530 = vmul.f32 %v232, %v461
  %v531 = vmul.f32 %v236, %v465
  %v532 = vmul.f32 %v238, %v467
  %v533 = vmul.f32 %v242, %v471
  %v534 = vmul.f32 %v244, %v473
  %v535 = vmul.f32 %v248, %v477
  %v536 = vmul.f32 %v250, %v479
  %v537 = vmul.f32 %v254, %v483
  %v538 = vmul.f32 %v256, %v485
  %v539 = vmul.f32 %v260, %v489
  %v540 = vmul.f32 %v262, %v491
  %v541 = vmul.f32 %v266, %v495
  %v542 = vmul.f32 %v268, %v497
  %v543 = vmul.f32 %v272, %v501
  %v544 = vmul.f32 %v274, %v503
  %v545 = vmul.f32 %v278, %v507
  %v546 = vmul.f32 %v280, %v509
  %v547 = vmul.f32 %v284, %v513
  %v548 = vmul.f32 %v286, %v515
  %v549 = vld [vmem:[%s6] sm:$0xff]
  %v550 = vld [vmem:[%s6 + $0x8] sm:$0xff]
  %v551 = vld [vmem:[%s6 + $0x10] sm:$0xff]
  %v552 = vld [vmem:[%s6 + $0x18] sm:$0xff]
  %v553 = vld [vmem:[%s6 + $0x20] sm:$0xff]
  %v554 = vld [vmem:[%s6 + $0x28] sm:$0xff]
  %v555 = vld [vmem:[%s6 + $0x30] sm:$0xff]
  %v556 = vld [vmem:[%s6 + $0x38] sm:$0xff]
  %v557 = vld [vmem:[%s6 + $0x40] sm:$0xff]
  %v558 = vld [vmem:[%s6 + $0x48] sm:$0xff]
  %v559 = vld [vmem:[%s6 + $0x50] sm:$0xff]
  %v560 = vld [vmem:[%s6 + $0x58] sm:$0xff]
  %v561 = vld [vmem:[%s6 + $0x60] sm:$0xff]
  %v562 = vld [vmem:[%s6 + $0x68] sm:$0xff]
  %v563 = vld [vmem:[%s6 + $0x70] sm:$0xff]
  %v564 = vld [vmem:[%s6 + $0x78] sm:$0xff]
  %v565 = vld [vmem:[%s6 + $0x80] sm:$0xff]
  %v566 = vld [vmem:[%s6 + $0x88] sm:$0xff]
  %v567 = vld [vmem:[%s6 + $0x90] sm:$0xff]
  %v568 = vld [vmem:[%s6 + $0x98] sm:$0xff]
  %v569 = vld [vmem:[%s6 + $0xa0] sm:$0xff]
  %v570 = vld [vmem:[%s6 + $0xa8] sm:$0xff]
  %v571 = vld [vmem:[%s6 + $0xb0] sm:$0xff]
  %v572 = vld [vmem:[%s6 + $0xb8] sm:$0xff]
  %v573 = vld [vmem:[%s6 + $0xc0] sm:$0xff]
  %v574 = vld [vmem:[%s6 + $0xc8] sm:$0xff]
  %v575 = vld [vmem:[%s6 + $0xd0] sm:$0xff]
  %v576 = vld [vmem:[%s6 + $0xd8] sm:$0xff]
  %v577 = vld [vmem:[%s6 + $0xe0] sm:$0xff]
  %v578 = vld [vmem:[%s6 + $0xe8] sm:$0xff]
  %v579 = vld [vmem:[%s6 + $0xf0] sm:$0xff]
  %v580 = vld [vmem:[%s6 + $0xf8] sm:$0xff]
  %v581 = vld [vmem:[%s6 + $0x100] sm:$0xff]
  %v582 = vld [vmem:[%s6 + $0x108] sm:$0xff]
  %v583 = vld [vmem:[%s6 + $0x110] sm:$0xff]
  %v584 = vld [vmem:[%s6 + $0x118] sm:$0xff]
  %v585 = vld [vmem:[%s6 + $0x120] sm:$0xff]
  %v586 = vld [vmem:[%s6 + $0x128] sm:$0xff]
  %v587 = vld [vmem:[%s6 + $0x130] sm:$0xff]
  %v588 = vld [vmem:[%s6 + $0x138] sm:$0xff]
  %v589 = vld [vmem:[%s6 + $0x140] sm:$0xff]
  %v590 = vld [vmem:[%s6 + $0x148] sm:$0xff]
  %v591 = vld [vmem:[%s6 + $0x150] sm:$0xff]
  %v592 = vld [vmem:[%s6 + $0x158] sm:$0xff]
  %v593 = vld [vmem:[%s6 + $0x160] sm:$0xff]
  %v594 = vld [vmem:[%s6 + $0x168] sm:$0xff]
  %v595 = vld [vmem:[%s6 + $0x170] sm:$0xff]
  %v596 = vld [vmem:[%s6 + $0x178] sm:$0xff]
  %v597 = vld [vmem:[%s6 + $0x180] sm:$0xff]
  %v598 = vld [vmem:[%s6 + $0x188] sm:$0xff]
  %v599 = vld [vmem:[%s6 + $0x190] sm:$0xff]
  %v600 = vld [vmem:[%s6 + $0x198] sm:$0xff]
  %v601 = vld [vmem:[%s6 + $0x1a0] sm:$0xff]
  %v602 = vld [vmem:[%s6 + $0x1a8] sm:$0xff]
  %v603 = vld [vmem:[%s6 + $0x1b0] sm:$0xff]
  %v604 = vld [vmem:[%s6 + $0x1b8] sm:$0xff]
  %v605 = vld [vmem:[%s6 + $0x1c0] sm:$0xff]
  %v606 = vld [vmem:[%s6 + $0x1c8] sm:$0xff]
  %v607 = vld [vmem:[%s6 + $0x1d0] sm:$0xff]
  %v608 = vld [vmem:[%s6 + $0x1d8] sm:$0xff]
  %v609 = vld [vmem:[%s6 + $0x1e0] sm:$0xff]
  %v610 = vld [vmem:[%s6 + $0x1e8] sm:$0xff]
  %v611 = vld [vmem:[%s6 + $0x1f0] sm:$0xff]
  %v612 = vld [vmem:[%s6 + $0x1f8] sm:$0xff]
  %v613 = vld [vmem:[%s7] sm:$0x3]
  %v615 = vlaneseq
  %v616 = vshrl.u32 %v615, 7
  %v617 = vsub.s32 0, %v616
  %v618 = vrot.slane %v613, %v617
  %v619 = vlaneseq
  %v620 = vshrl.u32 %v619, 7
  %v621 = vsub.s32 1, %v620
  %v622 = vrot.slane %v613, %v621
  %625 = vmatprep.subr.mxu0 %v550
  %626 = vmatpush1.msra.mxu0 %v549
  %627 = vmatprep.subr.mxu0 %v552
  %628 = vmatpush1.msra.mxu0 %v551
  %629 = vmatprep.subr.mxu0 %v554
  %630 = vmatpush1.msra.mxu0 %v553
  %631 = vmatprep.subr.mxu0 %v556
  %632 = vmatpush1.msra.mxu0 %v555
  %633 = vmatprep.subr.mxu0 %v558
  %634 = vmatpush1.msra.mxu0 %v557
  %635 = vmatprep.subr.mxu0 %v560
  %636 = vmatpush1.msra.mxu0 %v559
  %637 = vmatprep.subr.mxu0 %v562
  %638 = vmatpush1.msra.mxu0 %v561
  %639 = vmatprep.subr.mxu0 %v564
  %640 = vmatpush1.msra.mxu0 %v563
  %641 = vmatprep.subr.mxu0 %v566
  %642 = vmatpush1.msra.mxu0 %v565
  %643 = vmatprep.subr.mxu0 %v568
  %644 = vmatpush1.msra.mxu0 %v567
  %645 = vmatprep.subr.mxu0 %v570
  %646 = vmatpush1.msra.mxu0 %v569
  %647 = vmatprep.subr.mxu0 %v572
  %648 = vmatpush1.msra.mxu0 %v571
  %649 = vmatprep.subr.mxu0 %v574
  %650 = vmatpush1.msra.mxu0 %v573
  %651 = vmatprep.subr.mxu0 %v576
  %652 = vmatpush1.msra.mxu0 %v575
  %653 = vmatprep.subr.mxu0 %v578
  %654 = vmatpush1.msra.mxu0 %v577
  %655 = vmatprep.subr.mxu0 %v580
  %656 = vmatpush1.msra.mxu0 %v579
  %657 = vmatprep.subr.mxu0 %v582
  %658 = vmatpush1.msra.mxu0 %v581
  %659 = vmatprep.subr.mxu0 %v584
  %660 = vmatpush1.msra.mxu0 %v583
  %661 = vmatprep.subr.mxu0 %v586
  %662 = vmatpush1.msra.mxu0 %v585
  %663 = vmatprep.subr.mxu0 %v588
  %664 = vmatpush1.msra.mxu0 %v587
  %665 = vmatprep.subr.mxu0 %v590
  %666 = vmatpush1.msra.mxu0 %v589
  %667 = vmatprep.subr.mxu0 %v592
  %668 = vmatpush1.msra.mxu0 %v591
  %669 = vmatprep.subr.mxu0 %v594
  %670 = vmatpush1.msra.mxu0 %v593
  %671 = vmatprep.subr.mxu0 %v596
  %672 = vmatpush1.msra.mxu0 %v595
  %673 = vmatprep.subr.mxu0 %v598
  %674 = vmatpush1.msra.mxu0 %v597
  %675 = vmatprep.subr.mxu0 %v600
  %676 = vmatpush1.msra.mxu0 %v599
  %677 = vmatprep.subr.mxu0 %v602
  %678 = vmatpush1.msra.mxu0 %v601
  %679 = vmatprep.subr.mxu0 %v604
  %680 = vmatpush1.msra.mxu0 %v603
  %681 = vmatprep.subr.mxu0 %v606
  %682 = vmatpush1.msra.mxu0 %v605
  %683 = vmatprep.subr.mxu0 %v608
  %684 = vmatpush1.msra.mxu0 %v607
  %685 = vmatprep.subr.mxu0 %v610
  %686 = vmatpush1.msra.mxu0 %v609
  %687 = vmatprep.subr.mxu0 %v612
  %688 = vmatpush1.msra.mxu0 %v611
  %689 = vmatprep.mubr.f32.mxu0 %v518
  %690 = vmatmul.mubr.f32.gmra.mrb[0].mxu0 %v517
  %v691 = vpop.f32.mrb[0].mxu0
  %v692 = vadd.f32 %v618, %v691
  %v693 = vpop.f32.mrb[0].mxu0
  %v694 = vadd.f32 %v622, %v693
  %695 = vmatprep.mubr.f32.mxu0 %v520
  %696 = vmatmul.mubr.f32.gmra.mrb[0].mxu0 %v519
  %v697 = vpop.f32.mrb[0].mxu0
  %v698 = vadd.f32 %v618, %v697
  %v699 = vpop.f32.mrb[0].mxu0
  %v700 = vadd.f32 %v622, %v699
  %701 = vmatprep.mubr.f32.mxu0 %v522
  %702 = vmatmul.mubr.f32.gmra.mrb[0].mxu0 %v521
  %v703 = vpop.f32.mrb[0].mxu0
  %v704 = vadd.f32 %v618, %v703
  %v705 = vpop.f32.mrb[0].mxu0
  %v706 = vadd.f32 %v622, %v705
  %707 = vmatprep.mubr.f32.mxu0 %v524
  %708 = vmatmul.mubr.f32.gmra.mrb[0].mxu0 %v523
  %v709 = vpop.f32.mrb[0].mxu0
  %v710 = vadd.f32 %v618, %v709
  %v711 = vpop.f32.mrb[0].mxu0
  %v712 = vadd.f32 %v622, %v711
  %713 = vmatprep.mubr.f32.mxu0 %v526
  %714 = vmatmul.mubr.f32.gmra.mrb[0].mxu0 %v525
  %v715 = vpop.f32.mrb[0].mxu0
  %v716 = vadd.f32 %v618, %v715
  %v717 = vpop.f32.mrb[0].mxu0
  %v718 = vadd.f32 %v622, %v717
  %719 = vmatprep.mubr.f32.mxu0 %v528
  %720 = vmatmul.mubr.f32.gmra.mrb[0].mxu0 %v527
  %v721 = vpop.f32.mrb[0].mxu0
  %v722 = vadd.f32 %v618, %v721
  %v723 = vpop.f32.mrb[0].mxu0
  %v724 = vadd.f32 %v622, %v723
  %725 = vmatprep.mubr.f32.mxu0 %v530
  %726 = vmatmul.mubr.f32.gmra.mrb[0].mxu0 %v529
  %v727 = vpop.f32.mrb[0].mxu0
  %v728 = vadd.f32 %v618, %v727
  %v729 = vpop.f32.mrb[0].mxu0
  %v730 = vadd.f32 %v622, %v729
  %731 = vmatprep.mubr.f32.mxu0 %v532
  %732 = vmatmul.mubr.f32.gmra.mrb[0].mxu0 %v531
  %v733 = vpop.f32.mrb[0].mxu0
  %v734 = vadd.f32 %v618, %v733
  %v735 = vpop.f32.mrb[0].mxu0
  %v736 = vadd.f32 %v622, %v735
  %737 = vmatprep.mubr.f32.mxu0 %v534
  %738 = vmatmul.mubr.f32.gmra.mrb[0].mxu0 %v533
  %v739 = vpop.f32.mrb[0].mxu0
  %v740 = vadd.f32 %v618, %v739
  %v741 = vpop.f32.mrb[0].mxu0
  %v742 = vadd.f32 %v622, %v741
  %743 = vmatprep.mubr.f32.mxu0 %v536
  %744 = vmatmul.mubr.f32.gmra.mrb[0].mxu0 %v535
  %v745 = vpop.f32.mrb[0].mxu0
  %v746 = vadd.f32 %v618, %v745
  %v747 = vpop.f32.mrb[0].mxu0
  %v748 = vadd.f32 %v622, %v747
  %749 = vmatprep.mubr.f32.mxu0 %v538
  %750 = vmatmul.mubr.f32.gmra.mrb[0].mxu0 %v537
  %v751 = vpop.f32.mrb[0].mxu0
  %v752 = vadd.f32 %v618, %v751
  %v753 = vpop.f32.mrb[0].mxu0
  %v754 = vadd.f32 %v622, %v753
  %755 = vmatprep.mubr.f32.mxu0 %v540
  %756 = vmatmul.mubr.f32.gmra.mrb[0].mxu0 %v539
  %v757 = vpop.f32.mrb[0].mxu0
  %v758 = vadd.f32 %v618, %v757
  %v759 = vpop.f32.mrb[0].mxu0
  %v760 = vadd.f32 %v622, %v759
  %761 = vmatprep.mubr.f32.mxu0 %v542
  %762 = vmatmul.mubr.f32.gmra.mrb[0].mxu0 %v541
  %v763 = vpop.f32.mrb[0].mxu0
  %v764 = vadd.f32 %v618, %v763
  %v765 = vpop.f32.mrb[0].mxu0
  %v766 = vadd.f32 %v622, %v765
  %767 = vmatprep.mubr.f32.mxu0 %v544
  %768 = vmatmul.mubr.f32.gmra.mrb[0].mxu0 %v543
  %v769 = vpop.f32.mrb[0].mxu0
  %v770 = vadd.f32 %v618, %v769
  %v771 = vpop.f32.mrb[0].mxu0
  %v772 = vadd.f32 %v622, %v771
  %773 = vmatprep.mubr.f32.mxu0 %v546
  %774 = vmatmul.mubr.f32.gmra.mrb[0].mxu0 %v545
  %v775 = vpop.f32.mrb[0].mxu0
  %v776 = vadd.f32 %v618, %v775
  %v777 = vpop.f32.mrb[0].mxu0
  %v778 = vadd.f32 %v622, %v777
  %779 = vmatprep.mubr.f32.mxu0 %v548
  %780 = vmatmul.mubr.f32.gmra.mrb[0].mxu0 %v547
  %v781 = vpop.f32.mrb[0].mxu0
  %v782 = vadd.f32 %v618, %v781
  %v783 = vpop.f32.mrb[0].mxu0
  %v784 = vadd.f32 %v622, %v783
  %785 = vdwg.mxu0
  %v786 = vmax.f32 %v692, 0.0
  %v787 = vmax.f32 %v694, 0.0
  %v788 = vmax.f32 %v698, 0.0
  %v789 = vmax.f32 %v700, 0.0
  %v790 = vmax.f32 %v704, 0.0
  %v791 = vmax.f32 %v706, 0.0
  %v792 = vmax.f32 %v710, 0.0
  %v793 = vmax.f32 %v712, 0.0
  %v794 = vmax.f32 %v716, 0.0
  %v795 = vmax.f32 %v718, 0.0
  %v796 = vmax.f32 %v722, 0.0
  %v797 = vmax.f32 %v724, 0.0
  %v798 = vmax.f32 %v728, 0.0
  %v799 = vmax.f32 %v730, 0.0
  %v800 = vmax.f32 %v734, 0.0
  %v801 = vmax.f32 %v736, 0.0
  %v802 = vmax.f32 %v740, 0.0
  %v803 = vmax.f32 %v742, 0.0
  %v804 = vmax.f32 %v746, 0.0
  %v805 = vmax.f32 %v748, 0.0
  %v806 = vmax.f32 %v752, 0.0
  %v807 = vmax.f32 %v754, 0.0
  %v808 = vmax.f32 %v758, 0.0
  %v809 = vmax.f32 %v760, 0.0
  %v810 = vmax.f32 %v764, 0.0
  %v811 = vmax.f32 %v766, 0.0
  %v812 = vmax.f32 %v770, 0.0
  %v813 = vmax.f32 %v772, 0.0
  %v814 = vmax.f32 %v776, 0.0
  %v815 = vmax.f32 %v778, 0.0
  %v816 = vmax.f32 %v782, 0.0
  %v817 = vmax.f32 %v784, 0.0
  %v818 = vld [vmem:[%s8] sm:$0xff]
  %v819 = vld [vmem:[%s8 + $0x8] sm:$0xff]
  %v820 = vld [vmem:[%s8 + $0x10] sm:$0xff]
  %v821 = vld [vmem:[%s8 + $0x18] sm:$0xff]
  %v822 = vld [vmem:[%s8 + $0x20] sm:$0xff]
  %v823 = vld [vmem:[%s8 + $0x28] sm:$0xff]
  %v824 = vld [vmem:[%s8 + $0x30] sm:$0xff]
  %v825 = vld [vmem:[%s8 + $0x38] sm:$0xff]
  %v826 = vld [vmem:[%s8 + $0x40] sm:$0xff]
  %v827 = vld [vmem:[%s8 + $0x48] sm:$0xff]
  %v828 = vld [vmem:[%s8 + $0x50] sm:$0xff]
  %v829 = vld [vmem:[%s8 + $0x58] sm:$0xff]
  %v830 = vld [vmem:[%s8 + $0x60] sm:$0xff]
  %v831 = vld [vmem:[%s8 + $0x68] sm:$0xff]
  %v832 = vld [vmem:[%s8 + $0x70] sm:$0xff]
  %v833 = vld [vmem:[%s8 + $0x78] sm:$0xff]
  %v834 = vld [vmem:[%s8 + $0x80] sm:$0xff]
  %v835 = vld [vmem:[%s8 + $0x88] sm:$0xff]
  %v836 = vld [vmem:[%s8 + $0x90] sm:$0xff]
  %v837 = vld [vmem:[%s8 + $0x98] sm:$0xff]
  %v838 = vld [vmem:[%s8 + $0xa0] sm:$0xff]
  %v839 = vld [vmem:[%s8 + $0xa8] sm:$0xff]
  %v840 = vld [vmem:[%s8 + $0xb0] sm:$0xff]
  %v841 = vld [vmem:[%s8 + $0xb8] sm:$0xff]
  %v842 = vld [vmem:[%s8 + $0xc0] sm:$0xff]
  %v843 = vld [vmem:[%s8 + $0xc8] sm:$0xff]
  %v844 = vld [vmem:[%s8 + $0xd0] sm:$0xff]
  %v845 = vld [vmem:[%s8 + $0xd8] sm:$0xff]
  %v846 = vld [vmem:[%s8 + $0xe0] sm:$0xff]
  %v847 = vld [vmem:[%s8 + $0xe8] sm:$0xff]
  %v848 = vld [vmem:[%s8 + $0xf0] sm:$0xff]
  %v849 = vld [vmem:[%s8 + $0xf8] sm:$0xff]
  %v850 = vld [vmem:[%s9] sm:$0x1]
  %v852 = vlaneseq
  %v853 = vshrl.u32 %v852, 7
  %v854 = vsub.s32 0, %v853
  %v855 = vrot.slane %v850, %v854
  %857 = vmatprep.subr.mxu0 0.0
  %858 = vmatpush1.msra.mxu0 %v818
  %859 = vmatprep.subr.mxu0 0.0
  %860 = vmatpush1.msra.mxu0 %v819
  %861 = vmatprep.subr.mxu0 0.0
  %862 = vmatpush1.msra.mxu0 %v820
  %863 = vmatprep.subr.mxu0 0.0
  %864 = vmatpush1.msra.mxu0 %v821
  %865 = vmatprep.subr.mxu0 0.0
  %866 = vmatpush1.msra.mxu0 %v822
  %867 = vmatprep.subr.mxu0 0.0
  %868 = vmatpush1.msra.mxu0 %v823
  %869 = vmatprep.subr.mxu0 0.0
  %870 = vmatpush1.msra.mxu0 %v824
  %871 = vmatprep.subr.mxu0 0.0
  %872 = vmatpush1.msra.mxu0 %v825
  %873 = vmatprep.subr.mxu0 0.0
  %874 = vmatpush1.msra.mxu0 %v826
  %875 = vmatprep.subr.mxu0 0.0
  %876 = vmatpush1.msra.mxu0 %v827
  %877 = vmatprep.subr.mxu0 0.0
  %878 = vmatpush1.msra.mxu0 %v828
  %879 = vmatprep.subr.mxu0 0.0
  %880 = vmatpush1.msra.mxu0 %v829
  %881 = vmatprep.subr.mxu0 0.0
  %882 = vmatpush1.msra.mxu0 %v830
  %883 = vmatprep.subr.mxu0 0.0
  %884 = vmatpush1.msra.mxu0 %v831
  %885 = vmatprep.subr.mxu0 0.0
  %886 = vmatpush1.msra.mxu0 %v832
  %887 = vmatprep.subr.mxu0 0.0
  %888 = vmatpush1.msra.mxu0 %v833
  %889 = vmatprep.subr.mxu0 0.0
  %890 = vmatpush1.msra.mxu0 %v834
  %891 = vmatprep.subr.mxu0 0.0
  %892 = vmatpush1.msra.mxu0 %v835
  %893 = vmatprep.subr.mxu0 0.0
  %894 = vmatpush1.msra.mxu0 %v836
  %895 = vmatprep.subr.mxu0 0.0
  %896 = vmatpush1.msra.mxu0 %v837
  %897 = vmatprep.subr.mxu0 0.0
  %898 = vmatpush1.msra.mxu0 %v838
  %899 = vmatprep.subr.mxu0 0.0
  %900 = vmatpush1.msra.mxu0 %v839
  %901 = vmatprep.subr.mxu0 0.0
  %902 = vmatpush1.msra.mxu0 %v840
  %903 = vmatprep.subr.mxu0 0.0
  %904 = vmatpush1.msra.mxu0 %v841
  %905 = vmatprep.subr.mxu0 0.0
  %906 = vmatpush1.msra.mxu0 %v842
  %907 = vmatprep.subr.mxu0 0.0
  %908 = vmatpush1.msra.mxu0 %v843
  %909 = vmatprep.subr.mxu0 0.0
  %910 = vmatpush1.msra.mxu0 %v844
  %911 = vmatprep.subr.mxu0 0.0
  %912 = vmatpush1.msra.mxu0 %v845
  %913 = vmatprep.subr.mxu0 0.0
  %914 = vmatpush1.msra.mxu0 %v846
  %915 = vmatprep.subr.mxu0 0.0
  %916 = vmatpush1.msra.mxu0 %v847
  %917 = vmatprep.subr.mxu0 0.0
  %918 = vmatpush1.msra.mxu0 %v848
  %919 = vmatprep.subr.mxu0 0.0
  %920 = vmatpush1.msra.mxu0 %v849
  %921 = vmatprep.mubr.f32.mxu0 %v787
  %922 = vmatmul.mubr.f32.gmra.mrb[0].mxu0 %v786
  %v923 = vpop.f32.mrb[0].mxu0
  %v924 = vadd.f32 %v855, %v923
  %v925 = vpop.f32.mrb[0].mxu0
  %926 = vmatprep.mubr.f32.mxu0 %v789
  %927 = vmatmul.mubr.f32.gmra.mrb[0].mxu0 %v788
  %v928 = vpop.f32.mrb[0].mxu0
  %v929 = vadd.f32 %v855, %v928
  %v930 = vpop.f32.mrb[0].mxu0
  %931 = vmatprep.mubr.f32.mxu0 %v791
  %932 = vmatmul.mubr.f32.gmra.mrb[0].mxu0 %v790
  %v933 = vpop.f32.mrb[0].mxu0
  %v934 = vadd.f32 %v855, %v933
  %v935 = vpop.f32.mrb[0].mxu0
  %936 = vmatprep.mubr.f32.mxu0 %v793
  %937 = vmatmul.mubr.f32.gmra.mrb[0].mxu0 %v792
  %v938 = vpop.f32.mrb[0].mxu0
  %v939 = vadd.f32 %v855, %v938
  %v940 = vpop.f32.mrb[0].mxu0
  %941 = vmatprep.mubr.f32.mxu0 %v795
  %942 = vmatmul.mubr.f32.gmra.mrb[0].mxu0 %v794
  %v943 = vpop.f32.mrb[0].mxu0
  %v944 = vadd.f32 %v855, %v943
  %v945 = vpop.f32.mrb[0].mxu0
  %946 = vmatprep.mubr.f32.mxu0 %v797
  %947 = vmatmul.mubr.f32.gmra.mrb[0].mxu0 %v796
  %v948 = vpop.f32.mrb[0].mxu0
  %v949 = vadd.f32 %v855, %v948
  %v950 = vpop.f32.mrb[0].mxu0
  %951 = vmatprep.mubr.f32.mxu0 %v799
  %952 = vmatmul.mubr.f32.gmra.mrb[0].mxu0 %v798
  %v953 = vpop.f32.mrb[0].mxu0
  %v954 = vadd.f32 %v855, %v953
  %v955 = vpop.f32.mrb[0].mxu0
  %956 = vmatprep.mubr.f32.mxu0 %v801
  %957 = vmatmul.mubr.f32.gmra.mrb[0].mxu0 %v800
  %v958 = vpop.f32.mrb[0].mxu0
  %v959 = vadd.f32 %v855, %v958
  %v960 = vpop.f32.mrb[0].mxu0
  %961 = vmatprep.mubr.f32.mxu0 %v803
  %962 = vmatmul.mubr.f32.gmra.mrb[0].mxu0 %v802
  %v963 = vpop.f32.mrb[0].mxu0
  %v964 = vadd.f32 %v855, %v963
  %v965 = vpop.f32.mrb[0].mxu0
  %966 = vmatprep.mubr.f32.mxu0 %v805
  %967 = vmatmul.mubr.f32.gmra.mrb[0].mxu0 %v804
  %v968 = vpop.f32.mrb[0].mxu0
  %v969 = vadd.f32 %v855, %v968
  %v970 = vpop.f32.mrb[0].mxu0
  %971 = vmatprep.mubr.f32.mxu0 %v807
  %972 = vmatmul.mubr.f32.gmra.mrb[0].mxu0 %v806
  %v973 = vpop.f32.mrb[0].mxu0
  %v974 = vadd.f32 %v855, %v973
  %v975 = vpop.f32.mrb[0].mxu0
  %976 = vmatprep.mubr.f32.mxu0 %v809
  %977 = vmatmul.mubr.f32.gmra.mrb[0].mxu0 %v808
  %v978 = vpop.f32.mrb[0].mxu0
  %v979 = vadd.f32 %v855, %v978
  %v980 = vpop.f32.mrb[0].mxu0
  %981 = vmatprep.mubr.f32.mxu0 %v811
  %982 = vmatmul.mubr.f32.gmra.mrb[0].mxu0 %v810
  %v983 = vpop.f32.mrb[0].mxu0
  %v984 = vadd.f32 %v855, %v983
  %v985 = vpop.f32.mrb[0].mxu0
  %986 = vmatprep.mubr.f32.mxu0 %v813
  %987 = vmatmul.mubr.f32.gmra.mrb[0].mxu0 %v812
  %v988 = vpop.f32.mrb[0].mxu0
  %v989 = vadd.f32 %v855, %v988
  %v990 = vpop.f32.mrb[0].mxu0
  %991 = vmatprep.mubr.f32.mxu0 %v815
  %992 = vmatmul.mubr.f32.gmra.mrb[0].mxu0 %v814
  %v993 = vpop.f32.mrb[0].mxu0
  %v994 = vadd.f32 %v855, %v993
  %v995 = vpop.f32.mrb[0].mxu0
  %996 = vmatprep.mubr.f32.mxu0 %v817
  %997 = vmatmul.mubr.f32.gmra.mrb[0].mxu0 %v816
  %v998 = vpop.f32.mrb[0].mxu0
  %v999 = vadd.f32 %v855, %v998
  %v1000 = vpop.f32.mrb[0].mxu0
  %1001 = vdwg.mxu0
  %v1002 = vmax.f32 %v924, 0.0
  %v1003 = vmax.f32 %v929, 0.0
  %v1004 = vmax.f32 %v934, 0.0
  %v1005 = vmax.f32 %v939, 0.0
  %v1006 = vmax.f32 %v944, 0.0
  %v1007 = vmax.f32 %v949, 0.0
  %v1008 = vmax.f32 %v954, 0.0
  %v1009 = vmax.f32 %v959, 0.0
  %v1010 = vmax.f32 %v964, 0.0
  %v1011 = vmax.f32 %v969, 0.0
  %v1012 = vmax.f32 %v974, 0.0
  %v1013 = vmax.f32 %v979, 0.0
  %v1014 = vmax.f32 %v984, 0.0
  %v1015 = vmax.f32 %v989, 0.0
  %v1016 = vmax.f32 %v994, 0.0
  %v1017 = vmax.f32 %v999, 0.0
  %v1018 = vld [vmem:[%s10] sm:$0xff]
  %v1019 = vld [vmem:[%s10 + $0x8] sm:$0xff]
  %v1020 = vld [vmem:[%s10 + $0x10] sm:$0xff]
  %v1021 = vld [vmem:[%s10 + $0x18] sm:$0xff]
  %v1022 = vld [vmem:[%s10 + $0x20] sm:$0xff]
  %v1023 = vld [vmem:[%s10 + $0x28] sm:$0xff]
  %v1024 = vld [vmem:[%s10 + $0x30] sm:$0xff]
  %v1025 = vld [vmem:[%s10 + $0x38] sm:$0xff]
  %v1026 = vld [vmem:[%s10 + $0x40] sm:$0xff]
  %v1027 = vld [vmem:[%s10 + $0x48] sm:$0xff]
  %v1028 = vld [vmem:[%s10 + $0x50] sm:$0xff]
  %v1029 = vld [vmem:[%s10 + $0x58] sm:$0xff]
  %v1030 = vld [vmem:[%s10 + $0x60] sm:$0xff]
  %v1031 = vld [vmem:[%s10 + $0x68] sm:$0xff]
  %v1032 = vld [vmem:[%s10 + $0x70] sm:$0xff]
  %v1033 = vld [vmem:[%s10 + $0x78] sm:$0xff]
  %v1034 = vld [vmem:[%s11] sm:$0x1]
  %v1036 = vlaneseq
  %v1037 = vshrl.u32 %v1036, 7
  %v1038 = vsub.s32 0, %v1037
  %v1039 = vrot.slane %v1034, %v1038
  %1041 = vmatprep.subr.mxu0 0.0
  %1042 = vmatpush1.msra.mxu0 %v1018
  %1043 = vmatprep.subr.mxu0 0.0
  %1044 = vmatpush1.msra.mxu0 %v1019
  %1045 = vmatprep.subr.mxu0 0.0
  %1046 = vmatpush1.msra.mxu0 %v1020
  %1047 = vmatprep.subr.mxu0 0.0
  %1048 = vmatpush1.msra.mxu0 %v1021
  %1049 = vmatprep.subr.mxu0 0.0
  %1050 = vmatpush1.msra.mxu0 %v1022
  %1051 = vmatprep.subr.mxu0 0.0
  %1052 = vmatpush1.msra.mxu0 %v1023
  %1053 = vmatprep.subr.mxu0 0.0
  %1054 = vmatpush1.msra.mxu0 %v1024
  %1055 = vmatprep.subr.mxu0 0.0
  %1056 = vmatpush1.msra.mxu0 %v1025
  %1057 = vmatprep.subr.mxu0 0.0
  %1058 = vmatpush1.msra.mxu0 %v1026
  %1059 = vmatprep.subr.mxu0 0.0
  %1060 = vmatpush1.msra.mxu0 %v1027
  %1061 = vmatprep.subr.mxu0 0.0
  %1062 = vmatpush1.msra.mxu0 %v1028
  %1063 = vmatprep.subr.mxu0 0.0
  %1064 = vmatpush1.msra.mxu0 %v1029
  %1065 = vmatprep.subr.mxu0 0.0
  %1066 = vmatpush1.msra.mxu0 %v1030
  %1067 = vmatprep.subr.mxu0 0.0
  %1068 = vmatpush1.msra.mxu0 %v1031
  %1069 = vmatprep.subr.mxu0 0.0
  %1070 = vmatpush1.msra.mxu0 %v1032
  %1071 = vmatprep.subr.mxu0 0.0
  %1072 = vmatpush1.msra.mxu0 %v1033
  %1073 = vmatprep.subr.mxu0 0.0
  %1074 = vmatpush1.msra.mxu0 0.0
  %1075 = vmatprep.subr.mxu0 0.0
  %1076 = vmatpush1.msra.mxu0 0.0
  %1077 = vmatprep.subr.mxu0 0.0
  %1078 = vmatpush1.msra.mxu0 0.0
  %1079 = vmatprep.subr.mxu0 0.0
  %1080 = vmatpush1.msra.mxu0 0.0
  %1081 = vmatprep.subr.mxu0 0.0
  %1082 = vmatpush1.msra.mxu0 0.0
  %1083 = vmatprep.subr.mxu0 0.0
  %1084 = vmatpush1.msra.mxu0 0.0
  %1085 = vmatprep.subr.mxu0 0.0
  %1086 = vmatpush1.msra.mxu0 0.0
  %1087 = vmatprep.subr.mxu0 0.0
  %1088 = vmatpush1.msra.mxu0 0.0
  %1089 = vmatprep.subr.mxu0 0.0
  %1090 = vmatpush1.msra.mxu0 0.0
  %1091 = vmatprep.subr.mxu0 0.0
  %1092 = vmatpush1.msra.mxu0 0.0
  %1093 = vmatprep.subr.mxu0 0.0
  %1094 = vmatpush1.msra.mxu0 0.0
  %1095 = vmatprep.subr.mxu0 0.0
  %1096 = vmatpush1.msra.mxu0 0.0
  %1097 = vmatprep.subr.mxu0 0.0
  %1098 = vmatpush1.msra.mxu0 0.0
  %1099 = vmatprep.subr.mxu0 0.0
  %1100 = vmatpush1.msra.mxu0 0.0
  %1101 = vmatprep.subr.mxu0 0.0
  %1102 = vmatpush1.msra.mxu0 0.0
  %1103 = vmatprep.subr.mxu0 0.0
  %1104 = vmatpush1.msra.mxu0 0.0
  %1105 = vmatprep.mubr.f32.mxu0 0.0
  %1106 = vmatmul.mubr.f32.gmra.mrb[0].mxu0 %v1002
  %v1107 = vpop.f32.mrb[0].mxu0
  %v1108 = vadd.f32 %v1039, %v1107
  %v1109 = vpop.f32.mrb[0].mxu0
  %1110 = vmatprep.mubr.f32.mxu0 0.0
  %1111 = vmatmul.mubr.f32.gmra.mrb[0].mxu0 %v1003
  %v1112 = vpop.f32.mrb[0].mxu0
  %v1113 = vadd.f32 %v1039, %v1112
  %v1114 = vpop.f32.mrb[0].mxu0
  %1115 = vmatprep.mubr.f32.mxu0 0.0
  %1116 = vmatmul.mubr.f32.gmra.mrb[0].mxu0 %v1004
  %v1117 = vpop.f32.mrb[0].mxu0
  %v1118 = vadd.f32 %v1039, %v1117
  %v1119 = vpop.f32.mrb[0].mxu0
  %1120 = vmatprep.mubr.f32.mxu0 0.0
  %1121 = vmatmul.mubr.f32.gmra.mrb[0].mxu0 %v1005
  %v1122 = vpop.f32.mrb[0].mxu0
  %v1123 = vadd.f32 %v1039, %v1122
  %v1124 = vpop.f32.mrb[0].mxu0
  %1125 = vmatprep.mubr.f32.mxu0 0.0
  %1126 = vmatmul.mubr.f32.gmra.mrb[0].mxu0 %v1006
  %v1127 = vpop.f32.mrb[0].mxu0
  %v1128 = vadd.f32 %v1039, %v1127
  %v1129 = vpop.f32.mrb[0].mxu0
  %1130 = vmatprep.mubr.f32.mxu0 0.0
  %1131 = vmatmul.mubr.f32.gmra.mrb[0].mxu0 %v1007
  %v1132 = vpop.f32.mrb[0].mxu0
  %v1133 = vadd.f32 %v1039, %v1132
  %v1134 = vpop.f32.mrb[0].mxu0
  %1135 = vmatprep.mubr.f32.mxu0 0.0
  %1136 = vmatmul.mubr.f32.gmra.mrb[0].mxu0 %v1008
  %v1137 = vpop.f32.mrb[0].mxu0
  %v1138 = vadd.f32 %v1039, %v1137
  %v1139 = vpop.f32.mrb[0].mxu0
  %1140 = vmatprep.mubr.f32.mxu0 0.0
  %1141 = vmatmul.mubr.f32.gmra.mrb[0].mxu0 %v1009
  %v1142 = vpop.f32.mrb[0].mxu0
  %v1143 = vadd.f32 %v1039, %v1142
  %v1144 = vpop.f32.mrb[0].mxu0
  %1145 = vmatprep.mubr.f32.mxu0 0.0
  %1146 = vmatmul.mubr.f32.gmra.mrb[0].mxu0 %v1010
  %v1147 = vpop.f32.mrb[0].mxu0
  %v1148 = vadd.f32 %v1039, %v1147
  %v1149 = vpop.f32.mrb[0].mxu0
  %1150 = vmatprep.mubr.f32.mxu0 0.0
  %1151 = vmatmul.mubr.f32.gmra.mrb[0].mxu0 %v1011
  %v1152 = vpop.f32.mrb[0].mxu0
  %v1153 = vadd.f32 %v1039, %v1152
  %v1154 = vpop.f32.mrb[0].mxu0
  %1155 = vmatprep.mubr.f32.mxu0 0.0
  %1156 = vmatmul.mubr.f32.gmra.mrb[0].mxu0 %v1012
  %v1157 = vpop.f32.mrb[0].mxu0
  %v1158 = vadd.f32 %v1039, %v1157
  %v1159 = vpop.f32.mrb[0].mxu0
  %1160 = vmatprep.mubr.f32.mxu0 0.0
  %1161 = vmatmul.mubr.f32.gmra.mrb[0].mxu0 %v1013
  %v1162 = vpop.f32.mrb[0].mxu0
  %v1163 = vadd.f32 %v1039, %v1162
  %v1164 = vpop.f32.mrb[0].mxu0
  %1165 = vmatprep.mubr.f32.mxu0 0.0
  %1166 = vmatmul.mubr.f32.gmra.mrb[0].mxu0 %v1014
  %v1167 = vpop.f32.mrb[0].mxu0
  %v1168 = vadd.f32 %v1039, %v1167
  %v1169 = vpop.f32.mrb[0].mxu0
  %1170 = vmatprep.mubr.f32.mxu0 0.0
  %1171 = vmatmul.mubr.f32.gmra.mrb[0].mxu0 %v1015
  %v1172 = vpop.f32.mrb[0].mxu0
  %v1173 = vadd.f32 %v1039, %v1172
  %v1174 = vpop.f32.mrb[0].mxu0
  %1175 = vmatprep.mubr.f32.mxu0 0.0
  %1176 = vmatmul.mubr.f32.gmra.mrb[0].mxu0 %v1016
  %v1177 = vpop.f32.mrb[0].mxu0
  %v1178 = vadd.f32 %v1039, %v1177
  %v1179 = vpop.f32.mrb[0].mxu0
  %1180 = vmatprep.mubr.f32.mxu0 0.0
  %1181 = vmatmul.mubr.f32.gmra.mrb[0].mxu0 %v1017
  %v1182 = vpop.f32.mrb[0].mxu0
  %v1183 = vadd.f32 %v1039, %v1182
  %v1184 = vpop.f32.mrb[0].mxu0
  %1185 = vdwg.mxu0
  %v1186 = vmax.f32 %v1108, 0.0
  %v1187 = vmax.f32 %v1113, 0.0
  %v1188 = vmax.f32 %v1118, 0.0
  %v1189 = vmax.f32 %v1123, 0.0
  %v1190 = vmax.f32 %v1128, 0.0
  %v1191 = vmax.f32 %v1133, 0.0
  %v1192 = vmax.f32 %v1138, 0.0
  %v1193 = vmax.f32 %v1143, 0.0
  %v1194 = vmax.f32 %v1148, 0.0
  %v1195 = vmax.f32 %v1153, 0.0
  %v1196 = vmax.f32 %v1158, 0.0
  %v1197 = vmax.f32 %v1163, 0.0
  %v1198 = vmax.f32 %v1168, 0.0
  %v1199 = vmax.f32 %v1173, 0.0
  %v1200 = vmax.f32 %v1178, 0.0
  %v1201 = vmax.f32 %v1183, 0.0
  %v1202 = vld [vmem:[%s12] sm:$0xff]
  %v1203 = vld [vmem:[%s12 + $0x8] sm:$0xff]
  %v1204 = vld [vmem:[%s12 + $0x10] sm:$0xff]
  %v1205 = vld [vmem:[%s12 + $0x18] sm:$0xff]
  %v1206 = vld [vmem:[%s12 + $0x20] sm:$0xff]
  %v1207 = vld [vmem:[%s12 + $0x28] sm:$0xff]
  %v1208 = vld [vmem:[%s12 + $0x30] sm:$0xff]
  %v1209 = vld [vmem:[%s12 + $0x38] sm:$0xff]
  %v1210 = vld [vmem:[%s13] sm:$0x1]
  %v1212 = vlaneseq
  %v1213 = vshrl.u32 %v1212, 7
  %v1214 = vsub.s32 0, %v1213
  %v1215 = vrot.slane %v1210, %v1214
  %vm1217 = vcmask 523264
  %v1219 = vsel %vm1217, %v1186, 0
  %v1222 = vsel %vm1217, %v1187, 0
  %v1225 = vsel %vm1217, %v1188, 0
  %v1228 = vsel %vm1217, %v1189, 0
  %v1231 = vsel %vm1217, %v1190, 0
  %v1234 = vsel %vm1217, %v1191, 0
  %v1237 = vsel %vm1217, %v1192, 0
  %v1240 = vsel %vm1217, %v1193, 0
  %v1243 = vsel %vm1217, %v1194, 0
  %v1246 = vsel %vm1217, %v1195, 0
  %v1249 = vsel %vm1217, %v1196, 0
  %v1252 = vsel %vm1217, %v1197, 0
  %v1255 = vsel %vm1217, %v1198, 0
  %v1258 = vsel %vm1217, %v1199, 0
  %v1261 = vsel %vm1217, %v1200, 0
  %v1264 = vsel %vm1217, %v1201, 0
  %1266 = vmatprep.subr.mxu0 0.0
  %1267 = vmatpush1.msra.mxu0 %v1202
  %1268 = vmatprep.subr.mxu0 0.0
  %1269 = vmatpush1.msra.mxu0 %v1203
  %1270 = vmatprep.subr.mxu0 0.0
  %1271 = vmatpush1.msra.mxu0 %v1204
  %1272 = vmatprep.subr.mxu0 0.0
  %1273 = vmatpush1.msra.mxu0 %v1205
  %1274 = vmatprep.subr.mxu0 0.0
  %1275 = vmatpush1.msra.mxu0 %v1206
  %1276 = vmatprep.subr.mxu0 0.0
  %1277 = vmatpush1.msra.mxu0 %v1207
  %1278 = vmatprep.subr.mxu0 0.0
  %1279 = vmatpush1.msra.mxu0 %v1208
  %1280 = vmatprep.subr.mxu0 0.0
  %1281 = vmatpush1.msra.mxu0 %v1209
  %1282 = vmatprep.subr.mxu0 0.0
  %1283 = vmatpush1.msra.mxu0 0.0
  %1284 = vmatprep.subr.mxu0 0.0
  %1285 = vmatpush1.msra.mxu0 0.0
  %1286 = vmatprep.subr.mxu0 0.0
  %1287 = vmatpush1.msra.mxu0 0.0
  %1288 = vmatprep.subr.mxu0 0.0
  %1289 = vmatpush1.msra.mxu0 0.0
  %1290 = vmatprep.subr.mxu0 0.0
  %1291 = vmatpush1.msra.mxu0 0.0
  %1292 = vmatprep.subr.mxu0 0.0
  %1293 = vmatpush1.msra.mxu0 0.0
  %1294 = vmatprep.subr.mxu0 0.0
  %1295 = vmatpush1.msra.mxu0 0.0
  %1296 = vmatprep.subr.mxu0 0.0
  %1297 = vmatpush1.msra.mxu0 0.0
  %1298 = vmatprep.subr.mxu0 0.0
  %1299 = vmatpush1.msra.mxu0 0.0
  %1300 = vmatprep.subr.mxu0 0.0
  %1301 = vmatpush1.msra.mxu0 0.0
  %1302 = vmatprep.subr.mxu0 0.0
  %1303 = vmatpush1.msra.mxu0 0.0
  %1304 = vmatprep.subr.mxu0 0.0
  %1305 = vmatpush1.msra.mxu0 0.0
  %1306 = vmatprep.subr.mxu0 0.0
  %1307 = vmatpush1.msra.mxu0 0.0
  %1308 = vmatprep.subr.mxu0 0.0
  %1309 = vmatpush1.msra.mxu0 0.0
  %1310 = vmatprep.subr.mxu0 0.0
  %1311 = vmatpush1.msra.mxu0 0.0
  %1312 = vmatprep.subr.mxu0 0.0
  %1313 = vmatpush1.msra.mxu0 0.0
  %1314 = vmatprep.subr.mxu0 0.0
  %1315 = vmatpush1.msra.mxu0 0.0
  %1316 = vmatprep.subr.mxu0 0.0
  %1317 = vmatpush1.msra.mxu0 0.0
  %1318 = vmatprep.subr.mxu0 0.0
  %1319 = vmatpush1.msra.mxu0 0.0
  %1320 = vmatprep.subr.mxu0 0.0
  %1321 = vmatpush1.msra.mxu0 0.0
  %1322 = vmatprep.subr.mxu0 0.0
  %1323 = vmatpush1.msra.mxu0 0.0
  %1324 = vmatprep.subr.mxu0 0.0
  %1325 = vmatpush1.msra.mxu0 0.0
  %1326 = vmatprep.subr.mxu0 0.0
  %1327 = vmatpush1.msra.mxu0 0.0
  %1328 = vmatprep.subr.mxu0 0.0
  %1329 = vmatpush1.msra.mxu0 0.0
  %1330 = vmatprep.mubr.f32.mxu0 0.0
  %1331 = vmatmul.mubr.f32.gmra.mrb[0].mxu0 %v1219
  %v1332 = vpop.f32.mrb[0].mxu0
  %v1333 = vadd.f32 %v1215, %v1332
  %v1334 = vpop.f32.mrb[0].mxu0
  %1335 = vmatprep.mubr.f32.mxu0 0.0
  %1336 = vmatmul.mubr.f32.gmra.mrb[0].mxu0 %v1222
  %v1337 = vpop.f32.mrb[0].mxu0
  %v1338 = vadd.f32 %v1215, %v1337
  %v1339 = vpop.f32.mrb[0].mxu0
  %1340 = vmatprep.mubr.f32.mxu0 0.0
  %1341 = vmatmul.mubr.f32.gmra.mrb[0].mxu0 %v1225
  %v1342 = vpop.f32.mrb[0].mxu0
  %v1343 = vadd.f32 %v1215, %v1342
  %v1344 = vpop.f32.mrb[0].mxu0
  %1345 = vmatprep.mubr.f32.mxu0 0.0
  %1346 = vmatmul.mubr.f32.gmra.mrb[0].mxu0 %v1228
  %v1347 = vpop.f32.mrb[0].mxu0
  %v1348 = vadd.f32 %v1215, %v1347
  %v1349 = vpop.f32.mrb[0].mxu0
  %1350 = vmatprep.mubr.f32.mxu0 0.0
  %1351 = vmatmul.mubr.f32.gmra.mrb[0].mxu0 %v1231
  %v1352 = vpop.f32.mrb[0].mxu0
  %v1353 = vadd.f32 %v1215, %v1352
  %v1354 = vpop.f32.mrb[0].mxu0
  %1355 = vmatprep.mubr.f32.mxu0 0.0
  %1356 = vmatmul.mubr.f32.gmra.mrb[0].mxu0 %v1234
  %v1357 = vpop.f32.mrb[0].mxu0
  %v1358 = vadd.f32 %v1215, %v1357
  %v1359 = vpop.f32.mrb[0].mxu0
  %1360 = vmatprep.mubr.f32.mxu0 0.0
  %1361 = vmatmul.mubr.f32.gmra.mrb[0].mxu0 %v1237
  %v1362 = vpop.f32.mrb[0].mxu0
  %v1363 = vadd.f32 %v1215, %v1362
  %v1364 = vpop.f32.mrb[0].mxu0
  %1365 = vmatprep.mubr.f32.mxu0 0.0
  %1366 = vmatmul.mubr.f32.gmra.mrb[0].mxu0 %v1240
  %v1367 = vpop.f32.mrb[0].mxu0
  %v1368 = vadd.f32 %v1215, %v1367
  %v1369 = vpop.f32.mrb[0].mxu0
  %1370 = vmatprep.mubr.f32.mxu0 0.0
  %1371 = vmatmul.mubr.f32.gmra.mrb[0].mxu0 %v1243
  %v1372 = vpop.f32.mrb[0].mxu0
  %v1373 = vadd.f32 %v1215, %v1372
  %v1374 = vpop.f32.mrb[0].mxu0
  %1375 = vmatprep.mubr.f32.mxu0 0.0
  %1376 = vmatmul.mubr.f32.gmra.mrb[0].mxu0 %v1246
  %v1377 = vpop.f32.mrb[0].mxu0
  %v1378 = vadd.f32 %v1215, %v1377
  %v1379 = vpop.f32.mrb[0].mxu0
  %1380 = vmatprep.mubr.f32.mxu0 0.0
  %1381 = vmatmul.mubr.f32.gmra.mrb[0].mxu0 %v1249
  %v1382 = vpop.f32.mrb[0].mxu0
  %v1383 = vadd.f32 %v1215, %v1382
  %v1384 = vpop.f32.mrb[0].mxu0
  %1385 = vmatprep.mubr.f32.mxu0 0.0
  %1386 = vmatmul.mubr.f32.gmra.mrb[0].mxu0 %v1252
  %v1387 = vpop.f32.mrb[0].mxu0
  %v1388 = vadd.f32 %v1215, %v1387
  %v1389 = vpop.f32.mrb[0].mxu0
  %1390 = vmatprep.mubr.f32.mxu0 0.0
  %1391 = vmatmul.mubr.f32.gmra.mrb[0].mxu0 %v1255
  %v1392 = vpop.f32.mrb[0].mxu0
  %v1393 = vadd.f32 %v1215, %v1392
  %v1394 = vpop.f32.mrb[0].mxu0
  %1395 = vmatprep.mubr.f32.mxu0 0.0
  %1396 = vmatmul.mubr.f32.gmra.mrb[0].mxu0 %v1258
  %v1397 = vpop.f32.mrb[0].mxu0
  %v1398 = vadd.f32 %v1215, %v1397
  %v1399 = vpop.f32.mrb[0].mxu0
  %1400 = vmatprep.mubr.f32.mxu0 0.0
  %1401 = vmatmul.mubr.f32.gmra.mrb[0].mxu0 %v1261
  %v1402 = vpop.f32.mrb[0].mxu0
  %v1403 = vadd.f32 %v1215, %v1402
  %v1404 = vpop.f32.mrb[0].mxu0
  %1405 = vmatprep.mubr.f32.mxu0 0.0
  %1406 = vmatmul.mubr.f32.gmra.mrb[0].mxu0 %v1264
  %v1407 = vpop.f32.mrb[0].mxu0
  %v1408 = vadd.f32 %v1215, %v1407
  %v1409 = vpop.f32.mrb[0].mxu0
  %1410 = vdwg.mxu0
  %v1411 = vmax.f32 %v1333, 0.0
  %v1412 = vmax.f32 %v1338, 0.0
  %v1413 = vmax.f32 %v1343, 0.0
  %v1414 = vmax.f32 %v1348, 0.0
  %v1415 = vmax.f32 %v1353, 0.0
  %v1416 = vmax.f32 %v1358, 0.0
  %v1417 = vmax.f32 %v1363, 0.0
  %v1418 = vmax.f32 %v1368, 0.0
  %v1419 = vmax.f32 %v1373, 0.0
  %v1420 = vmax.f32 %v1378, 0.0
  %v1421 = vmax.f32 %v1383, 0.0
  %v1422 = vmax.f32 %v1388, 0.0
  %v1423 = vmax.f32 %v1393, 0.0
  %v1424 = vmax.f32 %v1398, 0.0
  %v1425 = vmax.f32 %v1403, 0.0
  %v1426 = vmax.f32 %v1408, 0.0
  %v1427 = vld [vmem:[%s2] sm:$0xff]
  %v1428 = vld [vmem:[%s2 + $0x8] sm:$0xff]
  %v1429 = vld [vmem:[%s2 + $0x10] sm:$0xff]
  %v1430 = vld [vmem:[%s2 + $0x18] sm:$0xff]
  %v1431 = vld [vmem:[%s2 + $0x20] sm:$0xff]
  %v1432 = vld [vmem:[%s2 + $0x28] sm:$0xff]
  %v1433 = vld [vmem:[%s2 + $0x30] sm:$0xff]
  %v1434 = vld [vmem:[%s2 + $0x38] sm:$0xff]
  %v1435 = vld [vmem:[%s2 + $0x40] sm:$0xff]
  %v1436 = vld [vmem:[%s2 + $0x48] sm:$0xff]
  %v1437 = vld [vmem:[%s2 + $0x50] sm:$0xff]
  %v1438 = vld [vmem:[%s2 + $0x58] sm:$0xff]
  %v1439 = vld [vmem:[%s2 + $0x60] sm:$0xff]
  %v1440 = vld [vmem:[%s2 + $0x68] sm:$0xff]
  %v1441 = vld [vmem:[%s2 + $0x70] sm:$0xff]
  %v1442 = vld [vmem:[%s2 + $0x78] sm:$0xff]
  %v1443 = vld [vmem:[%s3] sm:$0xff]
  %v1444 = vld [vmem:[%s3 + $0x8] sm:$0xff]
  %v1445 = vld [vmem:[%s3 + $0x10] sm:$0xff]
  %v1446 = vld [vmem:[%s3 + $0x18] sm:$0xff]
  %v1447 = vld [vmem:[%s3 + $0x20] sm:$0xff]
  %v1448 = vld [vmem:[%s3 + $0x28] sm:$0xff]
  %v1449 = vld [vmem:[%s3 + $0x30] sm:$0xff]
  %v1450 = vld [vmem:[%s3 + $0x38] sm:$0xff]
  %v1451 = vld [vmem:[%s3 + $0x40] sm:$0xff]
  %v1452 = vld [vmem:[%s3 + $0x48] sm:$0xff]
  %v1453 = vld [vmem:[%s3 + $0x50] sm:$0xff]
  %v1454 = vld [vmem:[%s3 + $0x58] sm:$0xff]
  %v1455 = vld [vmem:[%s3 + $0x60] sm:$0xff]
  %v1456 = vld [vmem:[%s3 + $0x68] sm:$0xff]
  %v1457 = vld [vmem:[%s3 + $0x70] sm:$0xff]
  %v1458 = vld [vmem:[%s3 + $0x78] sm:$0xff]
  %v1459 = vmul.f32 %v1427, %v1443
  %v1460 = vmul.f32 %v1428, %v1444
  %v1461 = vmul.f32 %v1429, %v1445
  %v1462 = vmul.f32 %v1430, %v1446
  %v1463 = vmul.f32 %v1431, %v1447
  %v1464 = vmul.f32 %v1432, %v1448
  %v1465 = vmul.f32 %v1433, %v1449
  %v1466 = vmul.f32 %v1434, %v1450
  %v1467 = vmul.f32 %v1435, %v1451
  %v1468 = vmul.f32 %v1436, %v1452
  %v1469 = vmul.f32 %v1437, %v1453
  %v1470 = vmul.f32 %v1438, %v1454
  %v1471 = vmul.f32 %v1439, %v1455
  %v1472 = vmul.f32 %v1440, %v1456
  %v1473 = vmul.f32 %v1441, %v1457
  %v1474 = vmul.f32 %v1442, %v1458
  %v1475 = vld [vmem:[%s14] sm:$0xff]
  %v1476 = vld [vmem:[%s15] sm:$0xff]
  %vm1477 = vcmask 261120
  %v1479 = vsel %vm1477, %v1476, 0
  %v1482 = vsel %vm1477, %v1411, 0
  %v1485 = vsel %vm1477, %v1412, 0
  %v1488 = vsel %vm1477, %v1413, 0
  %v1491 = vsel %vm1477, %v1414, 0
  %v1494 = vsel %vm1477, %v1415, 0
  %v1497 = vsel %vm1477, %v1416, 0
  %v1500 = vsel %vm1477, %v1417, 0
  %v1503 = vsel %vm1477, %v1418, 0
  %v1506 = vsel %vm1477, %v1419, 0
  %v1509 = vsel %vm1477, %v1420, 0
  %v1512 = vsel %vm1477, %v1421, 0
  %v1515 = vsel %vm1477, %v1422, 0
  %v1518 = vsel %vm1477, %v1423, 0
  %v1521 = vsel %vm1477, %v1424, 0
  %v1524 = vsel %vm1477, %v1425, 0
  %v1527 = vsel %vm1477, %v1426, 0
  %1529 = vmatprep.subr.mxu0 0.0
  %1530 = vmatpush1.xpose.msra.mxu0 %v1482
  %1531 = vmatprep.subr.mxu0 0.0
  %1532 = vmatpush1.xpose.msra.mxu0 %v1485
  %1533 = vmatprep.subr.mxu0 0.0
  %1534 = vmatpush1.xpose.msra.mxu0 %v1488
  %1535 = vmatprep.subr.mxu0 0.0
  %1536 = vmatpush1.xpose.msra.mxu0 %v1491
  %1537 = vmatprep.subr.mxu0 0.0
  %1538 = vmatpush1.xpose.msra.mxu0 %v1494
  %1539 = vmatprep.subr.mxu0 0.0
  %1540 = vmatpush1.xpose.msra.mxu0 %v1497
  %1541 = vmatprep.subr.mxu0 0.0
  %1542 = vmatpush1.xpose.msra.mxu0 %v1500
  %1543 = vmatprep.subr.mxu0 0.0
  %1544 = vmatpush1.xpose.msra.mxu0 %v1503
  %1545 = vmatprep.subr.mxu0 0.0
  %1546 = vmatpush1.xpose.msra.mxu0 %v1506
  %1547 = vmatprep.subr.mxu0 0.0
  %1548 = vmatpush1.xpose.msra.mxu0 %v1509
  %1549 = vmatprep.subr.mxu0 0.0
  %1550 = vmatpush1.xpose.msra.mxu0 %v1512
  %1551 = vmatprep.subr.mxu0 0.0
  %1552 = vmatpush1.xpose.msra.mxu0 %v1515
  %1553 = vmatprep.subr.mxu0 0.0
  %1554 = vmatpush1.xpose.msra.mxu0 %v1518
  %1555 = vmatprep.subr.mxu0 0.0
  %1556 = vmatpush1.xpose.msra.mxu0 %v1521
  %1557 = vmatprep.subr.mxu0 0.0
  %1558 = vmatpush1.xpose.msra.mxu0 %v1524
  %1559 = vmatprep.subr.mxu0 0.0
  %1560 = vmatpush1.xpose.msra.mxu0 %v1527
  %1561 = vmatprep.subr.mxu0 0.0
  %1562 = vmatpush1.xpose.msra.mxu0 0.0
  %1563 = vmatprep.subr.mxu0 0.0
  %1564 = vmatpush1.xpose.msra.mxu0 0.0
  %1565 = vmatprep.subr.mxu0 0.0
  %1566 = vmatpush1.xpose.msra.mxu0 0.0
  %1567 = vmatprep.subr.mxu0 0.0
  %1568 = vmatpush1.xpose.msra.mxu0 0.0
  %1569 = vmatprep.subr.mxu0 0.0
  %1570 = vmatpush1.xpose.msra.mxu0 0.0
  %1571 = vmatprep.subr.mxu0 0.0
  %1572 = vmatpush1.xpose.msra.mxu0 0.0
  %1573 = vmatprep.subr.mxu0 0.0
  %1574 = vmatpush1.xpose.msra.mxu0 0.0
  %1575 = vmatprep.subr.mxu0 0.0
  %1576 = vmatpush1.xpose.msra.mxu0 0.0
  %1577 = vmatprep.subr.mxu0 0.0
  %1578 = vmatpush1.xpose.msra.mxu0 0.0
  %1579 = vmatprep.subr.mxu0 0.0
  %1580 = vmatpush1.xpose.msra.mxu0 0.0
  %1581 = vmatprep.subr.mxu0 0.0
  %1582 = vmatpush1.xpose.msra.mxu0 0.0
  %1583 = vmatprep.subr.mxu0 0.0
  %1584 = vmatpush1.xpose.msra.mxu0 0.0
  %1585 = vmatprep.subr.mxu0 0.0
  %1586 = vmatpush1.xpose.msra.mxu0 0.0
  %1587 = vmatprep.subr.mxu0 0.0
  %1588 = vmatpush1.xpose.msra.mxu0 0.0
  %1589 = vmatprep.subr.mxu0 0.0
  %1590 = vmatpush1.xpose.msra.mxu0 0.0
  %1591 = vmatprep.subr.mxu0 0.0
  %1592 = vmatpush1.xpose.msra.mxu0 0.0
  %1593 = vmatprep.mubr.f32.mxu0 0.0
  %1594 = vmatmul.mubr.f32.gmra.mrb[0].mxu0 %v1479
  %v1595 = vpop.f32.mrb[0].mxu0
  %v1596 = vadd.f32 0.0, %v1595
  %v1597 = vpop.f32.mrb[0].mxu0
  %1598 = vdwg.mxu0
  %v1600 = vsel %vm78, %v1475, 0
  %v1603 = vsel %vm78, %v1459, 0
  %v1606 = vsel %vm78, %v1460, 0
  %v1609 = vsel %vm78, %v1461, 0
  %v1612 = vsel %vm78, %v1462, 0
  %v1615 = vsel %vm78, %v1463, 0
  %v1618 = vsel %vm78, %v1464, 0
  %v1621 = vsel %vm78, %v1465, 0
  %v1624 = vsel %vm78, %v1466, 0
  %v1627 = vsel %vm78, %v1467, 0
  %v1630 = vsel %vm78, %v1468, 0
  %v1633 = vsel %vm78, %v1469, 0
  %v1636 = vsel %vm78, %v1470, 0
  %v1639 = vsel %vm78, %v1471, 0
  %v1642 = vsel %vm78, %v1472, 0
  %v1645 = vsel %vm78, %v1473, 0
  %v1648 = vsel %vm78, %v1474, 0
  %1650 = vmatprep.subr.mxu0 0.0
  %1651 = vmatpush1.xpose.msra.mxu0 %v1603
  %1652 = vmatprep.subr.mxu0 0.0
  %1653 = vmatpush1.xpose.msra.mxu0 %v1606
  %1654 = vmatprep.subr.mxu0 0.0
  %1655 = vmatpush1.xpose.msra.mxu0 %v1609
  %1656 = vmatprep.subr.mxu0 0.0
  %1657 = vmatpush1.xpose.msra.mxu0 %v1612
  %1658 = vmatprep.subr.mxu0 0.0
  %1659 = vmatpush1.xpose.msra.mxu0 %v1615
  %1660 = vmatprep.subr.mxu0 0.0
  %1661 = vmatpush1.xpose.msra.mxu0 %v1618
  %1662 = vmatprep.subr.mxu0 0.0
  %1663 = vmatpush1.xpose.msra.mxu0 %v1621
  %1664 = vmatprep.subr.mxu0 0.0
  %1665 = vmatpush1.xpose.msra.mxu0 %v1624
  %1666 = vmatprep.subr.mxu0 0.0
  %1667 = vmatpush1.xpose.msra.mxu0 %v1627
  %1668 = vmatprep.subr.mxu0 0.0
  %1669 = vmatpush1.xpose.msra.mxu0 %v1630
  %1670 = vmatprep.subr.mxu0 0.0
  %1671 = vmatpush1.xpose.msra.mxu0 %v1633
  %1672 = vmatprep.subr.mxu0 0.0
  %1673 = vmatpush1.xpose.msra.mxu0 %v1636
  %1674 = vmatprep.subr.mxu0 0.0
  %1675 = vmatpush1.xpose.msra.mxu0 %v1639
  %1676 = vmatprep.subr.mxu0 0.0
  %1677 = vmatpush1.xpose.msra.mxu0 %v1642
  %1678 = vmatprep.subr.mxu0 0.0
  %1679 = vmatpush1.xpose.msra.mxu0 %v1645
  %1680 = vmatprep.subr.mxu0 0.0
  %1681 = vmatpush1.xpose.msra.mxu0 %v1648
  %1682 = vmatprep.subr.mxu0 0.0
  %1683 = vmatpush1.xpose.msra.mxu0 0.0
  %1684 = vmatprep.subr.mxu0 0.0
  %1685 = vmatpush1.xpose.msra.mxu0 0.0
  %1686 = vmatprep.subr.mxu0 0.0
  %1687 = vmatpush1.xpose.msra.mxu0 0.0
  %1688 = vmatprep.subr.mxu0 0.0
  %1689 = vmatpush1.xpose.msra.mxu0 0.0
  %1690 = vmatprep.subr.mxu0 0.0
  %1691 = vmatpush1.xpose.msra.mxu0 0.0
  %1692 = vmatprep.subr.mxu0 0.0
  %1693 = vmatpush1.xpose.msra.mxu0 0.0
  %1694 = vmatprep.subr.mxu0 0.0
  %1695 = vmatpush1.xpose.msra.mxu0 0.0
  %1696 = vmatprep.subr.mxu0 0.0
  %1697 = vmatpush1.xpose.msra.mxu0 0.0
  %1698 = vmatprep.subr.mxu0 0.0
  %1699 = vmatpush1.xpose.msra.mxu0 0.0
  %1700 = vmatprep.subr.mxu0 0.0
  %1701 = vmatpush1.xpose.msra.mxu0 0.0
  %1702 = vmatprep.subr.mxu0 0.0
  %1703 = vmatpush1.xpose.msra.mxu0 0.0
  %1704 = vmatprep.subr.mxu0 0.0
  %1705 = vmatpush1.xpose.msra.mxu0 0.0
  %1706 = vmatprep.subr.mxu0 0.0
  %1707 = vmatpush1.xpose.msra.mxu0 0.0
  %1708 = vmatprep.subr.mxu0 0.0
  %1709 = vmatpush1.xpose.msra.mxu0 0.0
  %1710 = vmatprep.subr.mxu0 0.0
  %1711 = vmatpush1.xpose.msra.mxu0 0.0
  %1712 = vmatprep.subr.mxu0 0.0
  %1713 = vmatpush1.xpose.msra.mxu0 0.0
  %1714 = vmatprep.mubr.f32.mxu0 0.0
  %1715 = vmatmul.mubr.f32.gmra.mrb[0].mxu0 %v1600
  %v1716 = vpop.f32.mrb[0].mxu0
  %v1717 = vadd.f32 %v1596, %v1716
  %v1718 = vpop.f32.mrb[0].mxu0
  %1719 = vdwg.mxu0
  %v1720 = vld [vmem:[#allocation2] sm:$0x1]
  %1722 = vset.pattern.permute.xlu0 0
  %1723 = vperm.xlu0 %1722, %v1720
  %v1724 = vpop.permute.xlu0 %1723
  %v1726 = vlaneseq
  %v1727 = vshrl.u32 %v1726, 7
  %v1728 = vsub.s32 0, %v1727
  %v1729 = vrot.slane %v1724, %v1728
  %v1730 = vadd.f32 %v1717, %v1729
  %1731 = vst [vmem:[%s17] sm:$0x1] %v1730
  // Predicated region
  $region70: #{oncf_forward.1} parent=0 // pred_check
    _
  $region71: #{oncf_forward.1} parent=0 // pred_check_branch
    %1733 = sbr.rel (0) target = $region73
  $region72: #{oncf_forward.1} parent=0 // pred_region
    _
  $region73: #{oncf_forward.1} parent=0 // pred_fallthru
    _
  // Predicated region
  $region74: #{oncf_forward.1} parent=0 // pred_check
    _
  $region75: #{oncf_forward.1} parent=0 // pred_check_branch
    %1735 = sbr.rel (0) target = $region77
  $region76: #{oncf_forward.1} parent=0 // pred_region
    _
  $region77: #{oncf_forward.1} parent=0 // pred_fallthru
    _

</llo_original>
